<compile_context>
chip_gen: v7x
topology: tpu7x:2x2x1
jax: 0.10.0
libtpu: 0.0.40
codegen_flags: <defaults>
</compile_context>

<pallas_src>
import functools

import numpy as np
import jax
import jax.numpy as jnp
from jax.experimental import pallas as pl
from jax.experimental.pallas import tpu as pltpu


# ----------------------------------------------------------------------------
# Fused kernel: conv1+ReLU+pool -> conv2+ReLU+pool -> flatten -> Linear -> BN
# (train-mode batch stats) -> ReLU -> Linear.  Whole batch in one block.
# ----------------------------------------------------------------------------
def simclr_kernel(x_ref, r1_ref, m1_ref, s2_ref, m2_ref, w1_ref, w2_ref,
                  c_ref, o_ref, *, B):
    f32 = jnp.float32
    n1 = 16 * B            # stage-1 rows per vertical tap (= 2 parities * 8B)
    n2 = 8 * B             # stage-2 rows per vertical tap (= 2 parities * 4B)

    cons = c_ref[...]
    b1 = cons[0:1, :]            # (1,256) conv1 bias tiled per (w-parity, w2, co)
    b2 = cons[1:2, :64]          # (1,64)  conv2 bias tiled
    bn_g = cons[2:3, :64]
    bn_b = cons[3:4, :64]
    pb2 = cons[4:5, :128]        # final bias, zero-padded to 128 lanes

    # ---- stage 1: stacked 3-tap row gather (one selection matmul) + banded conv
    # rx rows: [tap d][parity p][b][h2], lanes = w_in*3 + cin
    rx = jnp.dot(r1_ref[...], x_ref[...], preferred_element_type=f32)
    # c1 lanes: even-w half (128) | odd-w half (128); within a half w2*16 + co
    c1 = b1 + jnp.dot(rx[0:n1], m1_ref[0:48, :], preferred_element_type=f32)
    c1 = c1 + jnp.dot(rx[n1:2 * n1], m1_ref[48:96, :], preferred_element_type=f32)
    c1 = c1 + jnp.dot(rx[2 * n1:3 * n1], m1_ref[96:144, :], preferred_element_type=f32)
    c1 = jnp.maximum(c1, 0.0)                                    # (16B, 256)
    pw = jnp.maximum(c1[:, :128], c1[:, 128:])    # W-pool: aligned lane halves
    p1 = jnp.maximum(pw[:8 * B], pw[8 * B:])      # H-pool: row halves -> (8B,128)

    # ---- stage 2: same structure; rows emitted h2-major for the flatten
    sp = jnp.dot(s2_ref[...], p1, preferred_element_type=f32)    # (3*8B, 128)
    c2 = b2 + jnp.dot(sp[0:n2], m2_ref[0:128, :], preferred_element_type=f32)
    c2 = c2 + jnp.dot(sp[n2:2 * n2], m2_ref[128:256, :], preferred_element_type=f32)
    c2 = c2 + jnp.dot(sp[2 * n2:3 * n2], m2_ref[256:384, :], preferred_element_type=f32)
    c2 = jnp.maximum(c2, 0.0)                                    # (8B, 64)
    qw = jnp.maximum(c2[:, :32], c2[:, 32:])      # W-pool
    p2 = jnp.maximum(qw[:4 * B], qw[4 * B:])      # H-pool -> (4B,32), row = h2*B + b

    # ---- head Linear(128->64, no bias): NCHW flatten folded into 4 accumulated
    # matmuls over the h2 row-blocks of p2 (contiguous static slices, no concat).
    h1 = jnp.dot(p2[0:B], w1_ref[0:32, :], preferred_element_type=f32)
    h1 = h1 + jnp.dot(p2[B:2 * B], w1_ref[32:64, :], preferred_element_type=f32)
    h1 = h1 + jnp.dot(p2[2 * B:3 * B], w1_ref[64:96, :], preferred_element_type=f32)
    h1 = h1 + jnp.dot(p2[3 * B:4 * B], w1_ref[96:128, :], preferred_element_type=f32)

    # ---- BatchNorm1d (training-mode batch stats) -> ReLU -> Linear(64->32)
    mu = jnp.mean(h1, axis=0, keepdims=True)
    var = jnp.mean((h1 - mu) ** 2, axis=0, keepdims=True)        # biased (BN fwd)
    hn = (h1 - mu) * jax.lax.rsqrt(var + 1e-5)
    a = jnp.maximum(hn * bn_g + bn_b, 0.0)
    # lane-dense (B,128) output; valid logits live in lanes [0, 32)
    o_ref[...] = jnp.dot(a, w2_ref[...], preferred_element_type=f32) + pb2
    # TODO(synk): BatchNorm running_mean/running_var buffer updates (training
    # side effect) are not modeled; forward math matches train-mode batch stats.


# ----------------------------------------------------------------------------
# One-time parameter repacking
# ----------------------------------------------------------------------------
def _band_matrix(w, width_in):
    """w: (3,3,cin,cout).  Returns (3*width_in*cin, width_in*cout) so the conv
    (pad=1, stride=1) along W becomes `rows @ M` with
      input lanes (per vertical tap d): w_in*cin + ci
      output lanes: parity-major  p_w*(width_in//2*cout) + w2*cout + co,
      output position w_out = 2*w2 + p_w  (so the 2x W-pool is a max of the two
      aligned lane halves)."""
    kh, kw, cin, cout = w.shape
    wh = width_in // 2
    wnp = np.asarray(w, np.float32)
    m = np.zeros((kh, width_in, cin, 2, wh, cout), np.float32)
    for d in range(kh):
        for wi in range(width_in):
            for pwy in range(2):
                for w2 in range(wh):
                    dw = wi - (2 * w2 + pwy) + 1
                    if 0 <= dw < kw:
                        m[d, wi, :, pwy, w2, :] = wnp[d, dw, :, :]
    return jnp.asarray(m.reshape(kh * width_in * cin, width_in * cout))


def _select_matrix(B, h_in, batch_major):
    """Stacked (3 vertical taps) 0/1 row-selection matrix (3*2*B*(h_in//2), B*h_in).
    Output row [tap d][parity p][...] selects source row b*h_in + (2*h2+p+d-1)
    (all-zero row when out of range -> zero padding).  Within a (d,p) block rows
    are b-major (stage 1) or h2-major (stage 2, so the flatten uses contiguous
    h2 blocks)."""
    h2n = h_in // 2
    n = 2 * B * h2n
    S = np.zeros((3 * n, B * h_in), np.float32)
    for d in range(3):
        for p in range(2):
            for b in range(B):
                for h2 in range(h2n):
                    src = 2 * h2 + p + d - 1
                    if 0 <= src < h_in:
                        row = b * h2n + h2 if batch_major else h2 * B + b
                        S[d * n + p * (B * h2n) + row, b * h_in + src] = 1.0
    return jnp.asarray(S)


def _pack_head_w1(pw1):
    """Reorder Linear(128->64) rows to the kernel's p2 layout: block h2 (32 rows),
    row within block = w3*8 + c, sourced from NCHW flatten index c*16 + h2*4 + w3."""
    idx = np.zeros((4, 4, 8), np.int32)
    for h2 in range(4):
        for w3 in range(4):
            for c in range(8):
                idx[h2, w3, c] = c * 16 + h2 * 4 + w3
    return pw1[jnp.asarray(idx.reshape(-1))]                      # (128, 64)


def pack_params(params, B):
    consts = jnp.zeros((8, 256), jnp.float32)
    consts = consts.at[0, :].set(jnp.tile(params["cb1"], 16))     # conv1 bias tile
    consts = consts.at[1, :64].set(jnp.tile(params["cb2"], 8))    # conv2 bias tile
    consts = consts.at[2, :64].set(params["bn_g"])
    consts = consts.at[3, :64].set(params["bn_b"])
    consts = consts.at[4, :32].set(params["pb2"])
    w2 = jnp.zeros((64, 128), jnp.float32).at[:, :32].set(params["pw2"])
    return dict(
        r1=_select_matrix(B, 16, batch_major=True),    # (3*16B, 16B)
        m1=_band_matrix(params["cw1"], 16),            # (144, 256)
        s2=_select_matrix(B, 8, batch_major=False),    # (3*8B, 8B)
        m2=_band_matrix(params["cw2"], 8),             # (384, 64)
        w1=_pack_head_w1(params["pw1"]),               # (128, 64)
        w2=w2,                                         # (64, 128) lane-padded
        consts=consts,                                 # (8, 256)
    )


# ----------------------------------------------------------------------------
# Forward
# ----------------------------------------------------------------------------
@jax.jit
def simclr_forward(x_nchw, packed):
    B, C, H, W = x_nchw.shape                   # (B, 3, 16, 16)
    # Single small layout-prep fusion: NCHW -> per-(b,h) rows with (w, c) lanes.
    x_rows = jnp.transpose(x_nchw, (0, 2, 3, 1)).reshape(B * H, W * C)
    vmem = pl.BlockSpec(memory_space=pltpu.MemorySpace.VMEM)
    out = pl.pallas_call(
        functools.partial(simclr_kernel, B=B),
        out_shape=jax.ShapeDtypeStruct((B, 128), jnp.float32),
        in_specs=[vmem] * 8,
        out_specs=vmem,
    )(x_rows, packed["r1"], packed["m1"], packed["s2"], packed["m2"],
      packed["w1"], packed["w2"], packed["consts"])
    return out[:, :32]


# ----------------------------------------------------------------------------
# Params + pure-JAX reference (one-shot correctness check)
# ----------------------------------------------------------------------------
def init_params(key):
    ks = jax.random.split(key, 7)

    def uni(k, shape, fan_in):
        bound = 1.0 / float(fan_in) ** 0.5
        return jax.random.uniform(k, shape, jnp.float32, -bound, bound)

    return dict(
        cw1=uni(ks[0], (3, 3, 3, 16), 3 * 9),     # conv1 (kh, kw, cin, cout)
        cb1=uni(ks[1], (16,), 3 * 9),
        cw2=uni(ks[2], (3, 3, 16, 8), 16 * 9),    # conv2
        cb2=uni(ks[3], (8,), 16 * 9),
        pw1=uni(ks[4], (128, 64), 128),           # Linear(128->64), no bias (BN follows)
        bn_g=jnp.ones((64,), jnp.float32),
        bn_b=jnp.zeros((64,), jnp.float32),
        pw2=uni(ks[5], (64, 32), 64),             # Linear(64->32)
        pb2=uni(ks[6], (32,), 64),
    )


def reference_forward(x_nchw, params):
    x = jnp.transpose(x_nchw, (0, 2, 3, 1))

    def stage(h, w, b):
        y = jax.lax.conv_general_dilated(
            h, w, window_strides=(1, 1), padding=((1, 1), (1, 1)),
            dimension_numbers=("NHWC", "HWIO", "NHWC"))
        y = jnp.maximum(y + b, 0.0)
        return jax.lax.reduce_window(y, -jnp.inf, jax.lax.max,
                                     (1, 2, 2, 1), (1, 2, 2, 1), "VALID")

    h = stage(x, params["cw1"], params["cb1"])
    h = stage(h, params["cw2"], params["cb2"])
    feats = jnp.transpose(h, (0, 3, 1, 2)).reshape(x.shape[0], -1)   # NCHW flatten
    z = feats @ params["pw1"]
    mu = jnp.mean(z, axis=0, keepdims=True)
    var = jnp.mean((z - mu) ** 2, axis=0, keepdims=True)
    z = (z - mu) * jax.lax.rsqrt(var + 1e-5)
    z = jnp.maximum(z * params["bn_g"][None, :] + params["bn_b"][None, :], 0.0)
    return z @ params["pw2"] + params["pb2"][None, :]


if __name__ == "__main__":
    key = jax.random.PRNGKey(0)
    kx, kp = jax.random.split(key)
    params = init_params(kp)
    # Same kernel at B=2 (module-sized demo) and B=16 (more work per call: the
    # batch-scaling path requested by the perf review; all shapes derive from B).
    for B in (2, 16):
        x = jax.random.normal(jax.random.fold_in(kx, B), (B, 3, 16, 16), jnp.float32)
        packed = pack_params(params, B)
        z = simclr_forward(x, packed)
        jax.block_until_ready(z)
        assert z.shape == (B, 32) and z.dtype == jnp.float32
        z_ref = reference_forward(x, params)
        err = float(jnp.max(jnp.abs(z - z_ref)))
        assert err < 2e-3, f"B={B}: kernel/reference mismatch, max abs err = {err}"
    print("KERNEL_OK")
</pallas_src>

<mosaic_0001>
module attributes {stable_mosaic.version = 11 : i64} {
  func.func @simclr_kernel(%arg0: memref<32x48xf32, #tpu.memory_space<vmem>>, %arg1: memref<96x32xf32, #tpu.memory_space<vmem>>, %arg2: memref<144x256xf32, #tpu.memory_space<vmem>>, %arg3: memref<48x16xf32, #tpu.memory_space<vmem>>, %arg4: memref<384x64xf32, #tpu.memory_space<vmem>>, %arg5: memref<128x64xf32, #tpu.memory_space<vmem>>, %arg6: memref<64x128xf32, #tpu.memory_space<vmem>>, %arg7: memref<8x256xf32, #tpu.memory_space<vmem>>, %arg8: memref<2x128xf32, #tpu.memory_space<vmem>>) attributes {dimension_semantics = [], scalar_prefetch = 0 : i64, scratch_operands = 0 : i64, tpu.core_type = #tpu.core_type<tc>} {
    %c0 = arith.constant 0 : index
    %c0_0 = arith.constant 0 : index
    %0 = vector.load %arg7[%c0, %c0_0] : memref<8x256xf32, #tpu.memory_space<vmem>>, vector<8x256xf32>
    %1 = vector.extract_strided_slice %0 {offsets = [0, 0], sizes = [1, 256], strides = [1, 1]} : vector<8x256xf32> to vector<1x256xf32>
    %2 = vector.extract_strided_slice %0 {offsets = [1, 0], sizes = [1, 64], strides = [1, 1]} : vector<8x256xf32> to vector<1x64xf32>
    %3 = vector.extract_strided_slice %0 {offsets = [2, 0], sizes = [1, 64], strides = [1, 1]} : vector<8x256xf32> to vector<1x64xf32>
    %4 = vector.extract_strided_slice %0 {offsets = [3, 0], sizes = [1, 64], strides = [1, 1]} : vector<8x256xf32> to vector<1x64xf32>
    %5 = vector.extract_strided_slice %0 {offsets = [4, 0], sizes = [1, 128], strides = [1, 1]} : vector<8x256xf32> to vector<1x128xf32>
    %c0_1 = arith.constant 0 : index
    %c0_2 = arith.constant 0 : index
    %6 = vector.load %arg1[%c0_1, %c0_2] : memref<96x32xf32, #tpu.memory_space<vmem>>, vector<96x32xf32>
    %c0_3 = arith.constant 0 : index
    %c0_4 = arith.constant 0 : index
    %7 = vector.load %arg0[%c0_3, %c0_4] : memref<32x48xf32, #tpu.memory_space<vmem>>, vector<32x48xf32>
    %cst = arith.constant dense<0.000000e+00> : vector<96x48xf32>
    %8 = tpu.matmul %6, %7, %cst {dimension_numbers = #tpu.dot_dimension_numbers<[1], [0], [0], [1], [0, 0, 1, 1], [], []>} : vector<96x32xf32>, vector<32x48xf32>, vector<96x48xf32> -> vector<96x48xf32>
    %9 = vector.extract_strided_slice %8 {offsets = [0, 0], sizes = [32, 48], strides = [1, 1]} : vector<96x48xf32> to vector<32x48xf32>
    %c0_5 = arith.constant 0 : index
    %c0_6 = arith.constant 0 : index
    %10 = vector.load %arg2[%c0_5, %c0_6] : memref<144x256xf32, #tpu.memory_space<vmem>>, vector<48x256xf32>
    %cst_7 = arith.constant dense<0.000000e+00> : vector<32x256xf32>
    %11 = tpu.matmul %9, %10, %cst_7 {dimension_numbers = #tpu.dot_dimension_numbers<[1], [0], [0], [1], [0, 0, 1, 1], [], []>} : vector<32x48xf32>, vector<48x256xf32>, vector<32x256xf32> -> vector<32x256xf32>
    %12 = vector.broadcast %1 : vector<1x256xf32> to vector<32x256xf32>
    %13 = arith.addf %12, %11 : vector<32x256xf32>
    %14 = vector.extract_strided_slice %8 {offsets = [32, 0], sizes = [32, 48], strides = [1, 1]} : vector<96x48xf32> to vector<32x48xf32>
    %c48 = arith.constant 48 : index
    %c0_8 = arith.constant 0 : index
    %15 = vector.load %arg2[%c48, %c0_8] : memref<144x256xf32, #tpu.memory_space<vmem>>, vector<48x256xf32>
    %cst_9 = arith.constant dense<0.000000e+00> : vector<32x256xf32>
    %16 = tpu.matmul %14, %15, %cst_9 {dimension_numbers = #tpu.dot_dimension_numbers<[1], [0], [0], [1], [0, 0, 1, 1], [], []>} : vector<32x48xf32>, vector<48x256xf32>, vector<32x256xf32> -> vector<32x256xf32>
    %17 = arith.addf %13, %16 : vector<32x256xf32>
    %18 = vector.extract_strided_slice %8 {offsets = [64, 0], sizes = [32, 48], strides = [1, 1]} : vector<96x48xf32> to vector<32x48xf32>
    %c96 = arith.constant 96 : index
    %c0_10 = arith.constant 0 : index
    %19 = vector.load %arg2[%c96, %c0_10] : memref<144x256xf32, #tpu.memory_space<vmem>>, vector<48x256xf32>
    %cst_11 = arith.constant dense<0.000000e+00> : vector<32x256xf32>
    %20 = tpu.matmul %18, %19, %cst_11 {dimension_numbers = #tpu.dot_dimension_numbers<[1], [0], [0], [1], [0, 0, 1, 1], [], []>} : vector<32x48xf32>, vector<48x256xf32>, vector<32x256xf32> -> vector<32x256xf32>
    %21 = arith.addf %17, %20 : vector<32x256xf32>
    %cst_12 = arith.constant 0.000000e+00 : f32
    %22 = vector.broadcast %cst_12 : f32 to vector<32x256xf32>
    %23 = arith.maximumf %21, %22 : vector<32x256xf32>
    %24 = vector.extract_strided_slice %23 {offsets = [0, 0], sizes = [32, 128], strides = [1, 1]} : vector<32x256xf32> to vector<32x128xf32>
    %25 = vector.extract_strided_slice %23 {offsets = [0, 128], sizes = [32, 128], strides = [1, 1]} : vector<32x256xf32> to vector<32x128xf32>
    %26 = arith.maximumf %24, %25 : vector<32x128xf32>
    %27 = vector.extract_strided_slice %26 {offsets = [0, 0], sizes = [16, 128], strides = [1, 1]} : vector<32x128xf32> to vector<16x128xf32>
    %28 = vector.extract_strided_slice %26 {offsets = [16, 0], sizes = [16, 128], strides = [1, 1]} : vector<32x128xf32> to vector<16x128xf32>
    %29 = arith.maximumf %27, %28 : vector<16x128xf32>
    %c0_13 = arith.constant 0 : index
    %c0_14 = arith.constant 0 : index
    %30 = vector.load %arg3[%c0_13, %c0_14] : memref<48x16xf32, #tpu.memory_space<vmem>>, vector<48x16xf32>
    %cst_15 = arith.constant dense<0.000000e+00> : vector<48x128xf32>
    %31 = tpu.matmul %30, %29, %cst_15 {dimension_numbers = #tpu.dot_dimension_numbers<[1], [0], [0], [1], [0, 0, 1, 1], [], []>} : vector<48x16xf32>, vector<16x128xf32>, vector<48x128xf32> -> vector<48x128xf32>
    %32 = vector.extract_strided_slice %31 {offsets = [0, 0], sizes = [16, 128], strides = [1, 1]} : vector<48x128xf32> to vector<16x128xf32>
    %c0_16 = arith.constant 0 : index
    %c0_17 = arith.constant 0 : index
    %33 = vector.load %arg4[%c0_16, %c0_17] : memref<384x64xf32, #tpu.memory_space<vmem>>, vector<128x64xf32>
    %cst_18 = arith.constant dense<0.000000e+00> : vector<16x64xf32>
    %34 = tpu.matmul %32, %33, %cst_18 {dimension_numbers = #tpu.dot_dimension_numbers<[1], [0], [0], [1], [0, 0, 1, 1], [], []>} : vector<16x128xf32>, vector<128x64xf32>, vector<16x64xf32> -> vector<16x64xf32>
    %35 = vector.broadcast %2 : vector<1x64xf32> to vector<16x64xf32>
    %36 = arith.addf %35, %34 : vector<16x64xf32>
    %37 = vector.extract_strided_slice %31 {offsets = [16, 0], sizes = [16, 128], strides = [1, 1]} : vector<48x128xf32> to vector<16x128xf32>
    %c128 = arith.constant 128 : index
    %c0_19 = arith.constant 0 : index
    %38 = vector.load %arg4[%c128, %c0_19] : memref<384x64xf32, #tpu.memory_space<vmem>>, vector<128x64xf32>
    %cst_20 = arith.constant dense<0.000000e+00> : vector<16x64xf32>
    %39 = tpu.matmul %37, %38, %cst_20 {dimension_numbers = #tpu.dot_dimension_numbers<[1], [0], [0], [1], [0, 0, 1, 1], [], []>} : vector<16x128xf32>, vector<128x64xf32>, vector<16x64xf32> -> vector<16x64xf32>
    %40 = arith.addf %36, %39 : vector<16x64xf32>
    %41 = vector.extract_strided_slice %31 {offsets = [32, 0], sizes = [16, 128], strides = [1, 1]} : vector<48x128xf32> to vector<16x128xf32>
    %c256 = arith.constant 256 : index
    %c0_21 = arith.constant 0 : index
    %42 = vector.load %arg4[%c256, %c0_21] : memref<384x64xf32, #tpu.memory_space<vmem>>, vector<128x64xf32>
    %cst_22 = arith.constant dense<0.000000e+00> : vector<16x64xf32>
    %43 = tpu.matmul %41, %42, %cst_22 {dimension_numbers = #tpu.dot_dimension_numbers<[1], [0], [0], [1], [0, 0, 1, 1], [], []>} : vector<16x128xf32>, vector<128x64xf32>, vector<16x64xf32> -> vector<16x64xf32>
    %44 = arith.addf %40, %43 : vector<16x64xf32>
    %cst_23 = arith.constant 0.000000e+00 : f32
    %45 = vector.broadcast %cst_23 : f32 to vector<16x64xf32>
    %46 = arith.maximumf %44, %45 : vector<16x64xf32>
    %47 = vector.extract_strided_slice %46 {offsets = [0, 0], sizes = [16, 32], strides = [1, 1]} : vector<16x64xf32> to vector<16x32xf32>
    %48 = vector.extract_strided_slice %46 {offsets = [0, 32], sizes = [16, 32], strides = [1, 1]} : vector<16x64xf32> to vector<16x32xf32>
    %49 = arith.maximumf %47, %48 : vector<16x32xf32>
    %50 = vector.extract_strided_slice %49 {offsets = [0, 0], sizes = [8, 32], strides = [1, 1]} : vector<16x32xf32> to vector<8x32xf32>
    %51 = vector.extract_strided_slice %49 {offsets = [8, 0], sizes = [8, 32], strides = [1, 1]} : vector<16x32xf32> to vector<8x32xf32>
    %52 = arith.maximumf %50, %51 : vector<8x32xf32>
    %53 = vector.extract_strided_slice %52 {offsets = [0, 0], sizes = [2, 32], strides = [1, 1]} : vector<8x32xf32> to vector<2x32xf32>
    %c0_24 = arith.constant 0 : index
    %c0_25 = arith.constant 0 : index
    %54 = vector.load %arg5[%c0_24, %c0_25] : memref<128x64xf32, #tpu.memory_space<vmem>>, vector<32x64xf32>
    %cst_26 = arith.constant dense<0.000000e+00> : vector<2x64xf32>
    %55 = tpu.matmul %53, %54, %cst_26 {dimension_numbers = #tpu.dot_dimension_numbers<[1], [0], [0], [1], [0, 0, 1, 1], [], []>} : vector<2x32xf32>, vector<32x64xf32>, vector<2x64xf32> -> vector<2x64xf32>
    %56 = vector.extract_strided_slice %52 {offsets = [2, 0], sizes = [2, 32], strides = [1, 1]} : vector<8x32xf32> to vector<2x32xf32>
    %c32 = arith.constant 32 : index
    %c0_27 = arith.constant 0 : index
    %57 = vector.load %arg5[%c32, %c0_27] : memref<128x64xf32, #tpu.memory_space<vmem>>, vector<32x64xf32>
    %cst_28 = arith.constant dense<0.000000e+00> : vector<2x64xf32>
    %58 = tpu.matmul %56, %57, %cst_28 {dimension_numbers = #tpu.dot_dimension_numbers<[1], [0], [0], [1], [0, 0, 1, 1], [], []>} : vector<2x32xf32>, vector<32x64xf32>, vector<2x64xf32> -> vector<2x64xf32>
    %59 = arith.addf %55, %58 : vector<2x64xf32>
    %60 = vector.extract_strided_slice %52 {offsets = [4, 0], sizes = [2, 32], strides = [1, 1]} : vector<8x32xf32> to vector<2x32xf32>
    %c64 = arith.constant 64 : index
    %c0_29 = arith.constant 0 : index
    %61 = vector.load %arg5[%c64, %c0_29] : memref<128x64xf32, #tpu.memory_space<vmem>>, vector<32x64xf32>
    %cst_30 = arith.constant dense<0.000000e+00> : vector<2x64xf32>
    %62 = tpu.matmul %60, %61, %cst_30 {dimension_numbers = #tpu.dot_dimension_numbers<[1], [0], [0], [1], [0, 0, 1, 1], [], []>} : vector<2x32xf32>, vector<32x64xf32>, vector<2x64xf32> -> vector<2x64xf32>
    %63 = arith.addf %59, %62 : vector<2x64xf32>
    %64 = vector.extract_strided_slice %52 {offsets = [6, 0], sizes = [2, 32], strides = [1, 1]} : vector<8x32xf32> to vector<2x32xf32>
    %c96_31 = arith.constant 96 : index
    %c0_32 = arith.constant 0 : index
    %65 = vector.load %arg5[%c96_31, %c0_32] : memref<128x64xf32, #tpu.memory_space<vmem>>, vector<32x64xf32>
    %cst_33 = arith.constant dense<0.000000e+00> : vector<2x64xf32>
    %66 = tpu.matmul %64, %65, %cst_33 {dimension_numbers = #tpu.dot_dimension_numbers<[1], [0], [0], [1], [0, 0, 1, 1], [], []>} : vector<2x32xf32>, vector<32x64xf32>, vector<2x64xf32> -> vector<2x64xf32>
    %67 = arith.addf %63, %66 : vector<2x64xf32>
    %cst_34 = arith.constant dense<0.000000e+00> : vector<64xf32>
    %68 = vector.multi_reduction <add>, %67, %cst_34 [0] : vector<2x64xf32> to vector<64xf32>
    %69 = vector.shape_cast %68 : vector<64xf32> to vector<1x64xf32>
    %cst_35 = arith.constant 2.000000e+00 : f32
    %70 = vector.broadcast %cst_35 : f32 to vector<1x64xf32>
    %71 = arith.divf %69, %70 : vector<1x64xf32>
    %72 = vector.broadcast %71 : vector<1x64xf32> to vector<2x64xf32>
    %73 = arith.subf %67, %72 : vector<2x64xf32>
    %74 = arith.mulf %73, %73 : vector<2x64xf32>
    %cst_36 = arith.constant dense<0.000000e+00> : vector<64xf32>
    %75 = vector.multi_reduction <add>, %74, %cst_36 [0] : vector<2x64xf32> to vector<64xf32>
    %76 = vector.shape_cast %75 : vector<64xf32> to vector<1x64xf32>
    %cst_37 = arith.constant 2.000000e+00 : f32
    %77 = vector.broadcast %cst_37 : f32 to vector<1x64xf32>
    %78 = arith.divf %76, %77 : vector<1x64xf32>
    %79 = vector.broadcast %71 : vector<1x64xf32> to vector<2x64xf32>
    %80 = arith.subf %67, %79 : vector<2x64xf32>
    %cst_38 = arith.constant 9.99999974E-6 : f32
    %81 = vector.broadcast %cst_38 : f32 to vector<1x64xf32>
    %82 = arith.addf %78, %81 : vector<1x64xf32>
    %83 = math.rsqrt %82 : vector<1x64xf32>
    %84 = vector.broadcast %83 : vector<1x64xf32> to vector<2x64xf32>
    %85 = arith.mulf %80, %84 : vector<2x64xf32>
    %86 = vector.broadcast %3 : vector<1x64xf32> to vector<2x64xf32>
    %87 = arith.mulf %85, %86 : vector<2x64xf32>
    %88 = vector.broadcast %4 : vector<1x64xf32> to vector<2x64xf32>
    %89 = arith.addf %87, %88 : vector<2x64xf32>
    %cst_39 = arith.constant 0.000000e+00 : f32
    %90 = vector.broadcast %cst_39 : f32 to vector<2x64xf32>
    %91 = arith.maximumf %89, %90 : vector<2x64xf32>
    %c0_40 = arith.constant 0 : index
    %c0_41 = arith.constant 0 : index
    %92 = vector.load %arg6[%c0_40, %c0_41] : memref<64x128xf32, #tpu.memory_space<vmem>>, vector<64x128xf32>
    %cst_42 = arith.constant dense<0.000000e+00> : vector<2x128xf32>
    %93 = tpu.matmul %91, %92, %cst_42 {dimension_numbers = #tpu.dot_dimension_numbers<[1], [0], [0], [1], [0, 0, 1, 1], [], []>} : vector<2x64xf32>, vector<64x128xf32>, vector<2x128xf32> -> vector<2x128xf32>
    %94 = vector.broadcast %5 : vector<1x128xf32> to vector<2x128xf32>
    %95 = arith.addf %93, %94 : vector<2x128xf32>
    %c0_43 = arith.constant 0 : index
    %c0_44 = arith.constant 0 : index
    %96 = vector.load %arg8[%c0_43, %c0_44] : memref<2x128xf32, #tpu.memory_space<vmem>>, vector<2x128xf32>
    tpu.vector_store %arg8[%c0_43, %c0_44], %95 {strides = array<i32>} : memref<2x128xf32, #tpu.memory_space<vmem>>, vector<2x128xf32>,
    return
  }
}

</mosaic_0001>

<llo_original>
// kernel: simclr_forward.1
$region0: #{simclr_forward.1}
  #allocation0 [shape = 'u32[]', space=smem, size = 0x4, offset = 0x4, fixed_abs, tag = 'smem constant byte address 0x4 - core index']
  #allocation1 [shape = 'u32[144,128]{1,0:T(1,128)}', space=vmem, size = 0x12000, scoped, tag = 'internal scratch']
  %s0 = inlined_call_operand.vmem [shape: f32[32,48], index: 0, kind: input, shape index: {}]
  %s1 = inlined_call_operand.vmem [shape: f32[96,32], index: 1, kind: input, shape index: {}]
  %s2 = inlined_call_operand.vmem [shape: f32[144,256], index: 2, kind: input, shape index: {}]
  %s3 = inlined_call_operand.vmem [shape: f32[48,16], index: 3, kind: input, shape index: {}]
  %s4 = inlined_call_operand.vmem [shape: f32[384,64], index: 4, kind: input, shape index: {}]
  %s5 = inlined_call_operand.vmem [shape: f32[128,64], index: 5, kind: input, shape index: {}]
  %s6 = inlined_call_operand.vmem [shape: f32[64,128], index: 6, kind: input, shape index: {}]
  %s7 = inlined_call_operand.vmem [shape: f32[8,256], index: 7, kind: input, shape index: {}]
  %s8 = inlined_call_operand.hbm [shape: f32[2,128], index: 8, kind: output, shape index: {}]
  %s9 = sld [smem:[#allocation0]]
  $region42: #{simclr_forward.1} parent=0
    _
  %s11 = ssub.s32 1, %s9
  %s12 = scalar_select 0, %s11, %s9
  $region1: #{simclr_forward.1} parent=0
    #allocation2 [shape = 'u8[1024]{0}', space=vmem, size = 0x400, scoped, tag = 'output window, operand 0, single buffered']
    #allocation3 [shape = 's32[1]{0}', space=sflag, size = 0x4, scoped, tag = 'scoped memory for simclr_forward.1']
    %13 = vsyncpa [#allocation3], 0
    // Predicated region
    $region2: #{simclr_forward.1} parent=1 // pred_check
      _
    $region3: #{simclr_forward.1} parent=1 // pred_check_branch
      %15 = sbr.rel (0) target = $region5
    $region4: #{simclr_forward.1} parent=1 // pred_region
      _
    $region5: #{simclr_forward.1} parent=1 // pred_fallthru
      _
    // Predicated region
    $region6: #{simclr_forward.1} parent=1 // pred_check
      _
    $region7: #{simclr_forward.1} parent=1 // pred_check_branch
      %17 = sbr.rel (0) target = $region9
    $region8: #{simclr_forward.1} parent=1 // pred_region
      _
    $region9: #{simclr_forward.1} parent=1 // pred_fallthru
      _
    // Predicated region
    $region10: #{simclr_forward.1} parent=1 // pred_check
      _
    $region11: #{simclr_forward.1} parent=1 // pred_check_branch
      %19 = sbr.rel (0) target = $region13
    $region12: #{simclr_forward.1} parent=1 // pred_region
      _
    $region13: #{simclr_forward.1} parent=1 // pred_fallthru
      _
    // Predicated region
    $region14: #{simclr_forward.1} parent=1 // pred_check
      _
    $region15: #{simclr_forward.1} parent=1 // pred_check_branch
      %21 = sbr.rel (0) target = $region17
    $region16: #{simclr_forward.1} parent=1 // pred_region
      _
    $region17: #{simclr_forward.1} parent=1 // pred_fallthru
      _
    // Predicated region
    $region18: #{simclr_forward.1} parent=1 // pred_check
      _
    $region19: #{simclr_forward.1} parent=1 // pred_check_branch
      %23 = sbr.rel (0) target = $region21
    $region20: #{simclr_forward.1} parent=1 // pred_region
      _
    $region21: #{simclr_forward.1} parent=1 // pred_fallthru
      _
    // Predicated region
    $region22: #{simclr_forward.1} parent=1 // pred_check
      _
    $region23: #{simclr_forward.1} parent=1 // pred_check_branch
      %25 = sbr.rel (0) target = $region25
    $region24: #{simclr_forward.1} parent=1 // pred_region
      _
    $region25: #{simclr_forward.1} parent=1 // pred_fallthru
      _
    // Predicated region
    $region26: #{simclr_forward.1} parent=1 // pred_check
      _
    $region27: #{simclr_forward.1} parent=1 // pred_check_branch
      %27 = sbr.rel (0) target = $region29
    $region28: #{simclr_forward.1} parent=1 // pred_region
      _
    $region29: #{simclr_forward.1} parent=1 // pred_fallthru
      _
    // Predicated region
    $region30: #{simclr_forward.1} parent=1 // pred_check
      _
    $region31: #{simclr_forward.1} parent=1 // pred_check_branch
      %29 = sbr.rel (0) target = $region33
    $region32: #{simclr_forward.1} parent=1 // pred_region
      _
    $region33: #{simclr_forward.1} parent=1 // pred_fallthru
      _
    %v30 = vld [vmem:[%s7] sm:$0xff]
    %v31 = vld [vmem:[%s7 + $0x8] sm:$0xff]
    %v32 = vld [vmem:[%s1] sm:$0xff]
    %v33 = vld [vmem:[%s1 + $0x8] sm:$0xff]
    %v34 = vld [vmem:[%s1 + $0x10] sm:$0xff]
    %v35 = vld [vmem:[%s1 + $0x18] sm:$0xff]
    %v36 = vld [vmem:[%s1 + $0x20] sm:$0xff]
    %v37 = vld [vmem:[%s1 + $0x28] sm:$0xff]
    %v38 = vld [vmem:[%s1 + $0x30] sm:$0xff]
    %v39 = vld [vmem:[%s1 + $0x38] sm:$0xff]
    %v40 = vld [vmem:[%s1 + $0x40] sm:$0xff]
    %v41 = vld [vmem:[%s1 + $0x48] sm:$0xff]
    %v42 = vld [vmem:[%s1 + $0x50] sm:$0xff]
    %v43 = vld [vmem:[%s1 + $0x58] sm:$0xff]
    %v44 = vld [vmem:[%s0] sm:$0xff]
    %v45 = vld [vmem:[%s0 + $0x8] sm:$0xff]
    %v46 = vld [vmem:[%s0 + $0x10] sm:$0xff]
    %v47 = vld [vmem:[%s0 + $0x18] sm:$0xff]
    %vm48 = vcmask 261120
    %v50 = vsel %vm48, %v32, 0
    %v53 = vsel %vm48, %v33, 0
    %v56 = vsel %vm48, %v34, 0
    %v59 = vsel %vm48, %v35, 0
    %v62 = vsel %vm48, %v36, 0
    %v65 = vsel %vm48, %v37, 0
    %v68 = vsel %vm48, %v38, 0
    %v71 = vsel %vm48, %v39, 0
    %v74 = vsel %vm48, %v40, 0
    %v77 = vsel %vm48, %v41, 0
    %v80 = vsel %vm48, %v42, 0
    %v83 = vsel %vm48, %v43, 0
    %85 = vmatprep.subr.mxu0 0.0
    %86 = vmatpush1.msra.mxu0 %v44
    %87 = vmatprep.subr.mxu0 0.0
    %88 = vmatpush1.msra.mxu0 %v45
    %89 = vmatprep.subr.mxu0 0.0
    %90 = vmatpush1.msra.mxu0 %v46
    %91 = vmatprep.subr.mxu0 0.0
    %92 = vmatpush1.msra.mxu0 %v47
    %93 = vmatprep.subr.mxu0 0.0
    %94 = vmatpush1.msra.mxu0 0.0
    %95 = vmatprep.subr.mxu0 0.0
    %96 = vmatpush1.msra.mxu0 0.0
    %97 = vmatprep.subr.mxu0 0.0
    %98 = vmatpush1.msra.mxu0 0.0
    %99 = vmatprep.subr.mxu0 0.0
    %100 = vmatpush1.msra.mxu0 0.0
    %101 = vmatprep.subr.mxu0 0.0
    %102 = vmatpush1.msra.mxu0 0.0
    %103 = vmatprep.subr.mxu0 0.0
    %104 = vmatpush1.msra.mxu0 0.0
    %105 = vmatprep.subr.mxu0 0.0
    %106 = vmatpush1.msra.mxu0 0.0
    %107 = vmatprep.subr.mxu0 0.0
    %108 = vmatpush1.msra.mxu0 0.0
    %109 = vmatprep.subr.mxu0 0.0
    %110 = vmatpush1.msra.mxu0 0.0
    %111 = vmatprep.subr.mxu0 0.0
    %112 = vmatpush1.msra.mxu0 0.0
    %113 = vmatprep.subr.mxu0 0.0
    %114 = vmatpush1.msra.mxu0 0.0
    %115 = vmatprep.subr.mxu0 0.0
    %116 = vmatpush1.msra.mxu0 0.0
    %117 = vmatprep.subr.mxu0 0.0
    %118 = vmatpush1.msra.mxu0 0.0
    %119 = vmatprep.subr.mxu0 0.0
    %120 = vmatpush1.msra.mxu0 0.0
    %121 = vmatprep.subr.mxu0 0.0
    %122 = vmatpush1.msra.mxu0 0.0
    %123 = vmatprep.subr.mxu0 0.0
    %124 = vmatpush1.msra.mxu0 0.0
    %125 = vmatprep.subr.mxu0 0.0
    %126 = vmatpush1.msra.mxu0 0.0
    %127 = vmatprep.subr.mxu0 0.0
    %128 = vmatpush1.msra.mxu0 0.0
    %129 = vmatprep.subr.mxu0 0.0
    %130 = vmatpush1.msra.mxu0 0.0
    %131 = vmatprep.subr.mxu0 0.0
    %132 = vmatpush1.msra.mxu0 0.0
    %133 = vmatprep.subr.mxu0 0.0
    %134 = vmatpush1.msra.mxu0 0.0
    %135 = vmatprep.subr.mxu0 0.0
    %136 = vmatpush1.msra.mxu0 0.0
    %137 = vmatprep.subr.mxu0 0.0
    %138 = vmatpush1.msra.mxu0 0.0
    %139 = vmatprep.subr.mxu0 0.0
    %140 = vmatpush1.msra.mxu0 0.0
    %141 = vmatprep.subr.mxu0 0.0
    %142 = vmatpush1.msra.mxu0 0.0
    %143 = vmatprep.subr.mxu0 0.0
    %144 = vmatpush1.msra.mxu0 0.0
    %145 = vmatprep.subr.mxu0 0.0
    %146 = vmatpush1.msra.mxu0 0.0
    %147 = vmatprep.subr.mxu0 0.0
    %148 = vmatpush1.msra.mxu0 0.0
    %149 = vmatprep.mubr.f32.mxu0 0.0
    %150 = vmatmul.mubr.f32.gmra.mrb[0].mxu0 %v50
    %v151 = vpop.f32.mrb[0].mxu0
    %v152 = vadd.f32 0.0, %v151
    %v153 = vpop.f32.mrb[0].mxu0
    %154 = vmatprep.mubr.f32.mxu0 0.0
    %155 = vmatmul.mubr.f32.gmra.mrb[0].mxu0 %v53
    %v156 = vpop.f32.mrb[0].mxu0
    %v157 = vadd.f32 0.0, %v156
    %v158 = vpop.f32.mrb[0].mxu0
    %159 = vmatprep.mubr.f32.mxu0 0.0
    %160 = vmatmul.mubr.f32.gmra.mrb[0].mxu0 %v56
    %v161 = vpop.f32.mrb[0].mxu0
    %v162 = vadd.f32 0.0, %v161
    %v163 = vpop.f32.mrb[0].mxu0
    %164 = vmatprep.mubr.f32.mxu0 0.0
    %165 = vmatmul.mubr.f32.gmra.mrb[0].mxu0 %v59
    %v166 = vpop.f32.mrb[0].mxu0
    %v167 = vadd.f32 0.0, %v166
    %v168 = vpop.f32.mrb[0].mxu0
    %169 = vmatprep.mubr.f32.mxu0 0.0
    %170 = vmatmul.mubr.f32.gmra.mrb[0].mxu0 %v62
    %v171 = vpop.f32.mrb[0].mxu0
    %v172 = vadd.f32 0.0, %v171
    %v173 = vpop.f32.mrb[0].mxu0
    %174 = vmatprep.mubr.f32.mxu0 0.0
    %175 = vmatmul.mubr.f32.gmra.mrb[0].mxu0 %v65
    %v176 = vpop.f32.mrb[0].mxu0
    %v177 = vadd.f32 0.0, %v176
    %v178 = vpop.f32.mrb[0].mxu0
    %179 = vmatprep.mubr.f32.mxu0 0.0
    %180 = vmatmul.mubr.f32.gmra.mrb[0].mxu0 %v68
    %v181 = vpop.f32.mrb[0].mxu0
    %v182 = vadd.f32 0.0, %v181
    %v183 = vpop.f32.mrb[0].mxu0
    %184 = vmatprep.mubr.f32.mxu0 0.0
    %185 = vmatmul.mubr.f32.gmra.mrb[0].mxu0 %v71
    %v186 = vpop.f32.mrb[0].mxu0
    %v187 = vadd.f32 0.0, %v186
    %v188 = vpop.f32.mrb[0].mxu0
    %189 = vmatprep.mubr.f32.mxu0 0.0
    %190 = vmatmul.mubr.f32.gmra.mrb[0].mxu0 %v74
    %v191 = vpop.f32.mrb[0].mxu0
    %v192 = vadd.f32 0.0, %v191
    %v193 = vpop.f32.mrb[0].mxu0
    %194 = vmatprep.mubr.f32.mxu0 0.0
    %195 = vmatmul.mubr.f32.gmra.mrb[0].mxu0 %v77
    %v196 = vpop.f32.mrb[0].mxu0
    %v197 = vadd.f32 0.0, %v196
    %v198 = vpop.f32.mrb[0].mxu0
    %199 = vmatprep.mubr.f32.mxu0 0.0
    %200 = vmatmul.mubr.f32.gmra.mrb[0].mxu0 %v80
    %v201 = vpop.f32.mrb[0].mxu0
    %v202 = vadd.f32 0.0, %v201
    %v203 = vpop.f32.mrb[0].mxu0
    %204 = vmatprep.mubr.f32.mxu0 0.0
    %205 = vmatmul.mubr.f32.gmra.mrb[0].mxu0 %v83
    %v206 = vpop.f32.mrb[0].mxu0
    %v207 = vadd.f32 0.0, %v206
    %v208 = vpop.f32.mrb[0].mxu0
    %209 = vdwg.mxu0
    %v210 = vld [vmem:[%s2] sm:$0xff]
    %v211 = vld [vmem:[%s2 + $0x8] sm:$0xff]
    %v212 = vld [vmem:[%s2 + $0x10] sm:$0xff]
    %v213 = vld [vmem:[%s2 + $0x18] sm:$0xff]
    %v214 = vld [vmem:[%s2 + $0x20] sm:$0xff]
    %v215 = vld [vmem:[%s2 + $0x28] sm:$0xff]
    %v216 = vld [vmem:[%s2 + $0x30] sm:$0xff]
    %v217 = vld [vmem:[%s2 + $0x38] sm:$0xff]
    %v218 = vld [vmem:[%s2 + $0x40] sm:$0xff]
    %v219 = vld [vmem:[%s2 + $0x48] sm:$0xff]
    %v220 = vld [vmem:[%s2 + $0x50] sm:$0xff]
    %v221 = vld [vmem:[%s2 + $0x58] sm:$0xff]
    %vm222 = vcmask 392192
    %v224 = vsel %vm222, %v152, 0
    %v227 = vsel %vm222, %v157, 0
    %v230 = vsel %vm222, %v162, 0
    %v233 = vsel %vm222, %v167, 0
    %235 = vmatprep.subr.mxu0 %v211
    %236 = vmatpush1.msra.mxu0 %v210
    %237 = vmatprep.subr.mxu0 %v213
    %238 = vmatpush1.msra.mxu0 %v212
    %239 = vmatprep.subr.mxu0 %v215
    %240 = vmatpush1.msra.mxu0 %v214
    %241 = vmatprep.subr.mxu0 %v217
    %242 = vmatpush1.msra.mxu0 %v216
    %243 = vmatprep.subr.mxu0 %v219
    %244 = vmatpush1.msra.mxu0 %v218
    %245 = vmatprep.subr.mxu0 %v221
    %246 = vmatpush1.msra.mxu0 %v220
    %247 = vmatprep.subr.mxu0 0.0
    %248 = vmatpush1.msra.mxu0 0.0
    %249 = vmatprep.subr.mxu0 0.0
    %250 = vmatpush1.msra.mxu0 0.0
    %251 = vmatprep.subr.mxu0 0.0
    %252 = vmatpush1.msra.mxu0 0.0
    %253 = vmatprep.subr.mxu0 0.0
    %254 = vmatpush1.msra.mxu0 0.0
    %255 = vmatprep.subr.mxu0 0.0
    %256 = vmatpush1.msra.mxu0 0.0
    %257 = vmatprep.subr.mxu0 0.0
    %258 = vmatpush1.msra.mxu0 0.0
    %259 = vmatprep.subr.mxu0 0.0
    %260 = vmatpush1.msra.mxu0 0.0
    %261 = vmatprep.subr.mxu0 0.0
    %262 = vmatpush1.msra.mxu0 0.0
    %263 = vmatprep.subr.mxu0 0.0
    %264 = vmatpush1.msra.mxu0 0.0
    %265 = vmatprep.subr.mxu0 0.0
    %266 = vmatpush1.msra.mxu0 0.0
    %267 = vmatprep.subr.mxu0 0.0
    %268 = vmatpush1.msra.mxu0 0.0
    %269 = vmatprep.subr.mxu0 0.0
    %270 = vmatpush1.msra.mxu0 0.0
    %271 = vmatprep.subr.mxu0 0.0
    %272 = vmatpush1.msra.mxu0 0.0
    %273 = vmatprep.subr.mxu0 0.0
    %274 = vmatpush1.msra.mxu0 0.0
    %275 = vmatprep.subr.mxu0 0.0
    %276 = vmatpush1.msra.mxu0 0.0
    %277 = vmatprep.subr.mxu0 0.0
    %278 = vmatpush1.msra.mxu0 0.0
    %279 = vmatprep.subr.mxu0 0.0
    %280 = vmatpush1.msra.mxu0 0.0
    %281 = vmatprep.subr.mxu0 0.0
    %282 = vmatpush1.msra.mxu0 0.0
    %283 = vmatprep.subr.mxu0 0.0
    %284 = vmatpush1.msra.mxu0 0.0
    %285 = vmatprep.subr.mxu0 0.0
    %286 = vmatpush1.msra.mxu0 0.0
    %287 = vmatprep.subr.mxu0 0.0
    %288 = vmatpush1.msra.mxu0 0.0
    %289 = vmatprep.subr.mxu0 0.0
    %290 = vmatpush1.msra.mxu0 0.0
    %291 = vmatprep.subr.mxu0 0.0
    %292 = vmatpush1.msra.mxu0 0.0
    %293 = vmatprep.subr.mxu0 0.0
    %294 = vmatpush1.msra.mxu0 0.0
    %295 = vmatprep.subr.mxu0 0.0
    %296 = vmatpush1.msra.mxu0 0.0
    %297 = vmatprep.subr.mxu0 0.0
    %298 = vmatpush1.msra.mxu0 0.0
    %299 = vmatprep.mubr.f32.mxu0 0.0
    %300 = vmatmul.mubr.f32.gmra.mrb[0].mxu0 %v224
    %v301 = vpop.f32.mrb[0].mxu0
    %v302 = vadd.f32 0.0, %v301
    %v303 = vpop.f32.mrb[0].mxu0
    %v304 = vadd.f32 0.0, %v303
    %305 = vmatprep.mubr.f32.mxu0 0.0
    %306 = vmatmul.mubr.f32.gmra.mrb[0].mxu0 %v227
    %v307 = vpop.f32.mrb[0].mxu0
    %v308 = vadd.f32 0.0, %v307
    %v309 = vpop.f32.mrb[0].mxu0
    %v310 = vadd.f32 0.0, %v309
    %311 = vmatprep.mubr.f32.mxu0 0.0
    %312 = vmatmul.mubr.f32.gmra.mrb[0].mxu0 %v230
    %v313 = vpop.f32.mrb[0].mxu0
    %v314 = vadd.f32 0.0, %v313
    %v315 = vpop.f32.mrb[0].mxu0
    %v316 = vadd.f32 0.0, %v315
    %317 = vmatprep.mubr.f32.mxu0 0.0
    %318 = vmatmul.mubr.f32.gmra.mrb[0].mxu0 %v233
    %v319 = vpop.f32.mrb[0].mxu0
    %v320 = vadd.f32 0.0, %v319
    %v321 = vpop.f32.mrb[0].mxu0
    %v322 = vadd.f32 0.0, %v321
    %323 = vdwg.mxu0
    %v324 = vlaneseq
    %v325 = vshrl.u32 %v324, 7
    %v326 = vsub.s32 0, %v325
    %v327 = vrot.slane %v30, %v326
    %v328 = vlaneseq
    %v329 = vshrl.u32 %v328, 7
    %v330 = vsub.s32 0, %v329
    %v331 = vrot.slane %v31, %v330
    %v332 = vadd.f32 %v327, %v302
    %v333 = vadd.f32 %v331, %v304
    %v334 = vadd.f32 %v327, %v308
    %v335 = vadd.f32 %v331, %v310
    %v336 = vadd.f32 %v327, %v314
    %v337 = vadd.f32 %v331, %v316
    %v338 = vadd.f32 %v327, %v320
    %v339 = vadd.f32 %v331, %v322
    %v340 = vld [vmem:[%s2 + $0x60] sm:$0xff]
    %v341 = vld [vmem:[%s2 + $0x68] sm:$0xff]
    %v342 = vld [vmem:[%s2 + $0x70] sm:$0xff]
    %v343 = vld [vmem:[%s2 + $0x78] sm:$0xff]
    %v344 = vld [vmem:[%s2 + $0x80] sm:$0xff]
    %v345 = vld [vmem:[%s2 + $0x88] sm:$0xff]
    %v346 = vld [vmem:[%s2 + $0x90] sm:$0xff]
    %v347 = vld [vmem:[%s2 + $0x98] sm:$0xff]
    %v348 = vld [vmem:[%s2 + $0xa0] sm:$0xff]
    %v349 = vld [vmem:[%s2 + $0xa8] sm:$0xff]
    %v350 = vld [vmem:[%s2 + $0xb0] sm:$0xff]
    %v351 = vld [vmem:[%s2 + $0xb8] sm:$0xff]
    %v353 = vsel %vm222, %v172, 0
    %v356 = vsel %vm222, %v177, 0
    %v359 = vsel %vm222, %v182, 0
    %v362 = vsel %vm222, %v187, 0
    %364 = vmatprep.subr.mxu0 %v341
    %365 = vmatpush1.msra.mxu0 %v340
    %366 = vmatprep.subr.mxu0 %v343
    %367 = vmatpush1.msra.mxu0 %v342
    %368 = vmatprep.subr.mxu0 %v345
    %369 = vmatpush1.msra.mxu0 %v344
    %370 = vmatprep.subr.mxu0 %v347
    %371 = vmatpush1.msra.mxu0 %v346
    %372 = vmatprep.subr.mxu0 %v349
    %373 = vmatpush1.msra.mxu0 %v348
    %374 = vmatprep.subr.mxu0 %v351
    %375 = vmatpush1.msra.mxu0 %v350
    %376 = vmatprep.subr.mxu0 0.0
    %377 = vmatpush1.msra.mxu0 0.0
    %378 = vmatprep.subr.mxu0 0.0
    %379 = vmatpush1.msra.mxu0 0.0
    %380 = vmatprep.subr.mxu0 0.0
    %381 = vmatpush1.msra.mxu0 0.0
    %382 = vmatprep.subr.mxu0 0.0
    %383 = vmatpush1.msra.mxu0 0.0
    %384 = vmatprep.subr.mxu0 0.0
    %385 = vmatpush1.msra.mxu0 0.0
    %386 = vmatprep.subr.mxu0 0.0
    %387 = vmatpush1.msra.mxu0 0.0
    %388 = vmatprep.subr.mxu0 0.0
    %389 = vmatpush1.msra.mxu0 0.0
    %390 = vmatprep.subr.mxu0 0.0
    %391 = vmatpush1.msra.mxu0 0.0
    %392 = vmatprep.subr.mxu0 0.0
    %393 = vmatpush1.msra.mxu0 0.0
    %394 = vmatprep.subr.mxu0 0.0
    %395 = vmatpush1.msra.mxu0 0.0
    %396 = vmatprep.subr.mxu0 0.0
    %397 = vmatpush1.msra.mxu0 0.0
    %398 = vmatprep.subr.mxu0 0.0
    %399 = vmatpush1.msra.mxu0 0.0
    %400 = vmatprep.subr.mxu0 0.0
    %401 = vmatpush1.msra.mxu0 0.0
    %402 = vmatprep.subr.mxu0 0.0
    %403 = vmatpush1.msra.mxu0 0.0
    %404 = vmatprep.subr.mxu0 0.0
    %405 = vmatpush1.msra.mxu0 0.0
    %406 = vmatprep.subr.mxu0 0.0
    %407 = vmatpush1.msra.mxu0 0.0
    %408 = vmatprep.subr.mxu0 0.0
    %409 = vmatpush1.msra.mxu0 0.0
    %410 = vmatprep.subr.mxu0 0.0
    %411 = vmatpush1.msra.mxu0 0.0
    %412 = vmatprep.subr.mxu0 0.0
    %413 = vmatpush1.msra.mxu0 0.0
    %414 = vmatprep.subr.mxu0 0.0
    %415 = vmatpush1.msra.mxu0 0.0
    %416 = vmatprep.subr.mxu0 0.0
    %417 = vmatpush1.msra.mxu0 0.0
    %418 = vmatprep.subr.mxu0 0.0
    %419 = vmatpush1.msra.mxu0 0.0
    %420 = vmatprep.subr.mxu0 0.0
    %421 = vmatpush1.msra.mxu0 0.0
    %422 = vmatprep.subr.mxu0 0.0
    %423 = vmatpush1.msra.mxu0 0.0
    %424 = vmatprep.subr.mxu0 0.0
    %425 = vmatpush1.msra.mxu0 0.0
    %426 = vmatprep.subr.mxu0 0.0
    %427 = vmatpush1.msra.mxu0 0.0
    %428 = vmatprep.mubr.f32.mxu0 0.0
    %429 = vmatmul.mubr.f32.gmra.mrb[0].mxu0 %v353
    %v430 = vpop.f32.mrb[0].mxu0
    %v431 = vadd.f32 0.0, %v430
    %v432 = vpop.f32.mrb[0].mxu0
    %v433 = vadd.f32 0.0, %v432
    %434 = vmatprep.mubr.f32.mxu0 0.0
    %435 = vmatmul.mubr.f32.gmra.mrb[0].mxu0 %v356
    %v436 = vpop.f32.mrb[0].mxu0
    %v437 = vadd.f32 0.0, %v436
    %v438 = vpop.f32.mrb[0].mxu0
    %v439 = vadd.f32 0.0, %v438
    %440 = vmatprep.mubr.f32.mxu0 0.0
    %441 = vmatmul.mubr.f32.gmra.mrb[0].mxu0 %v359
    %v442 = vpop.f32.mrb[0].mxu0
    %v443 = vadd.f32 0.0, %v442
    %v444 = vpop.f32.mrb[0].mxu0
    %v445 = vadd.f32 0.0, %v444
    %446 = vmatprep.mubr.f32.mxu0 0.0
    %447 = vmatmul.mubr.f32.gmra.mrb[0].mxu0 %v362
    %v448 = vpop.f32.mrb[0].mxu0
    %v449 = vadd.f32 0.0, %v448
    %v450 = vpop.f32.mrb[0].mxu0
    %v451 = vadd.f32 0.0, %v450
    %452 = vdwg.mxu0
    %v453 = vadd.f32 %v332, %v431
    %v454 = vadd.f32 %v333, %v433
    %v455 = vadd.f32 %v334, %v437
    %v456 = vadd.f32 %v335, %v439
    %v457 = vadd.f32 %v336, %v443
    %v458 = vadd.f32 %v337, %v445
    %v459 = vadd.f32 %v338, %v449
    %v460 = vadd.f32 %v339, %v451
    %v461 = vld [vmem:[%s2 + $0xc0] sm:$0xff]
    %v462 = vld [vmem:[%s2 + $0xc8] sm:$0xff]
    %v463 = vld [vmem:[%s2 + $0xd0] sm:$0xff]
    %v464 = vld [vmem:[%s2 + $0xd8] sm:$0xff]
    %v465 = vld [vmem:[%s2 + $0xe0] sm:$0xff]
    %v466 = vld [vmem:[%s2 + $0xe8] sm:$0xff]
    %v467 = vld [vmem:[%s2 + $0xf0] sm:$0xff]
    %v468 = vld [vmem:[%s2 + $0xf8] sm:$0xff]
    %v469 = vld [vmem:[%s2 + $0x100] sm:$0xff]
    %v470 = vld [vmem:[%s2 + $0x108] sm:$0xff]
    %v471 = vld [vmem:[%s2 + $0x110] sm:$0xff]
    %v472 = vld [vmem:[%s2 + $0x118] sm:$0xff]
    %v474 = vsel %vm222, %v192, 0
    %v477 = vsel %vm222, %v197, 0
    %v480 = vsel %vm222, %v202, 0
    %v483 = vsel %vm222, %v207, 0
    %485 = vmatprep.subr.mxu0 %v462
    %486 = vmatpush1.msra.mxu0 %v461
    %487 = vmatprep.subr.mxu0 %v464
    %488 = vmatpush1.msra.mxu0 %v463
    %489 = vmatprep.subr.mxu0 %v466
    %490 = vmatpush1.msra.mxu0 %v465
    %491 = vmatprep.subr.mxu0 %v468
    %492 = vmatpush1.msra.mxu0 %v467
    %493 = vmatprep.subr.mxu0 %v470
    %494 = vmatpush1.msra.mxu0 %v469
    %495 = vmatprep.subr.mxu0 %v472
    %496 = vmatpush1.msra.mxu0 %v471
    %497 = vmatprep.subr.mxu0 0.0
    %498 = vmatpush1.msra.mxu0 0.0
    %499 = vmatprep.subr.mxu0 0.0
    %500 = vmatpush1.msra.mxu0 0.0
    %501 = vmatprep.subr.mxu0 0.0
    %502 = vmatpush1.msra.mxu0 0.0
    %503 = vmatprep.subr.mxu0 0.0
    %504 = vmatpush1.msra.mxu0 0.0
    %505 = vmatprep.subr.mxu0 0.0
    %506 = vmatpush1.msra.mxu0 0.0
    %507 = vmatprep.subr.mxu0 0.0
    %508 = vmatpush1.msra.mxu0 0.0
    %509 = vmatprep.subr.mxu0 0.0
    %510 = vmatpush1.msra.mxu0 0.0
    %511 = vmatprep.subr.mxu0 0.0
    %512 = vmatpush1.msra.mxu0 0.0
    %513 = vmatprep.subr.mxu0 0.0
    %514 = vmatpush1.msra.mxu0 0.0
    %515 = vmatprep.subr.mxu0 0.0
    %516 = vmatpush1.msra.mxu0 0.0
    %517 = vmatprep.subr.mxu0 0.0
    %518 = vmatpush1.msra.mxu0 0.0
    %519 = vmatprep.subr.mxu0 0.0
    %520 = vmatpush1.msra.mxu0 0.0
    %521 = vmatprep.subr.mxu0 0.0
    %522 = vmatpush1.msra.mxu0 0.0
    %523 = vmatprep.subr.mxu0 0.0
    %524 = vmatpush1.msra.mxu0 0.0
    %525 = vmatprep.subr.mxu0 0.0
    %526 = vmatpush1.msra.mxu0 0.0
    %527 = vmatprep.subr.mxu0 0.0
    %528 = vmatpush1.msra.mxu0 0.0
    %529 = vmatprep.subr.mxu0 0.0
    %530 = vmatpush1.msra.mxu0 0.0
    %531 = vmatprep.subr.mxu0 0.0
    %532 = vmatpush1.msra.mxu0 0.0
    %533 = vmatprep.subr.mxu0 0.0
    %534 = vmatpush1.msra.mxu0 0.0
    %535 = vmatprep.subr.mxu0 0.0
    %536 = vmatpush1.msra.mxu0 0.0
    %537 = vmatprep.subr.mxu0 0.0
    %538 = vmatpush1.msra.mxu0 0.0
    %539 = vmatprep.subr.mxu0 0.0
    %540 = vmatpush1.msra.mxu0 0.0
    %541 = vmatprep.subr.mxu0 0.0
    %542 = vmatpush1.msra.mxu0 0.0
    %543 = vmatprep.subr.mxu0 0.0
    %544 = vmatpush1.msra.mxu0 0.0
    %545 = vmatprep.subr.mxu0 0.0
    %546 = vmatpush1.msra.mxu0 0.0
    %547 = vmatprep.subr.mxu0 0.0
    %548 = vmatpush1.msra.mxu0 0.0
    %549 = vmatprep.mubr.f32.mxu0 0.0
    %550 = vmatmul.mubr.f32.gmra.mrb[0].mxu0 %v474
    %v551 = vpop.f32.mrb[0].mxu0
    %v552 = vadd.f32 0.0, %v551
    %v553 = vpop.f32.mrb[0].mxu0
    %v554 = vadd.f32 0.0, %v553
    %555 = vmatprep.mubr.f32.mxu0 0.0
    %556 = vmatmul.mubr.f32.gmra.mrb[0].mxu0 %v477
    %v557 = vpop.f32.mrb[0].mxu0
    %v558 = vadd.f32 0.0, %v557
    %v559 = vpop.f32.mrb[0].mxu0
    %v560 = vadd.f32 0.0, %v559
    %561 = vmatprep.mubr.f32.mxu0 0.0
    %562 = vmatmul.mubr.f32.gmra.mrb[0].mxu0 %v480
    %v563 = vpop.f32.mrb[0].mxu0
    %v564 = vadd.f32 0.0, %v563
    %v565 = vpop.f32.mrb[0].mxu0
    %v566 = vadd.f32 0.0, %v565
    %567 = vmatprep.mubr.f32.mxu0 0.0
    %568 = vmatmul.mubr.f32.gmra.mrb[0].mxu0 %v483
    %v569 = vpop.f32.mrb[0].mxu0
    %v570 = vadd.f32 0.0, %v569
    %v571 = vpop.f32.mrb[0].mxu0
    %v572 = vadd.f32 0.0, %v571
    %573 = vdwg.mxu0
    %v574 = vadd.f32 %v453, %v552
    %v575 = vadd.f32 %v454, %v554
    %v576 = vadd.f32 %v455, %v558
    %v577 = vadd.f32 %v456, %v560
    %v578 = vadd.f32 %v457, %v564
    %v579 = vadd.f32 %v458, %v566
    %v580 = vadd.f32 %v459, %v570
    %v581 = vadd.f32 %v460, %v572
    %v582 = vmax.f32 %v574, 0.0
    %v583 = vmax.f32 %v575, 0.0
    %v584 = vmax.f32 %v576, 0.0
    %v585 = vmax.f32 %v577, 0.0
    %v586 = vmax.f32 %v578, 0.0
    %v587 = vmax.f32 %v579, 0.0
    %v588 = vmax.f32 %v580, 0.0
    %v589 = vmax.f32 %v581, 0.0
    %v590 = vmax.f32 %v582, %v583
    %v591 = vmax.f32 %v584, %v585
    %v592 = vmax.f32 %v586, %v587
    %v593 = vmax.f32 %v588, %v589
    %v594 = vmax.f32 %v590, %v592
    %v595 = vmax.f32 %v591, %v593
    %v596 = vld [vmem:[%s3] sm:$0xff]
    %v597 = vld [vmem:[%s3 + $0x8] sm:$0xff]
    %v598 = vld [vmem:[%s3 + $0x10] sm:$0xff]
    %v599 = vld [vmem:[%s3 + $0x18] sm:$0xff]
    %v600 = vld [vmem:[%s3 + $0x20] sm:$0xff]
    %v601 = vld [vmem:[%s3 + $0x28] sm:$0xff]
    %vm602 = vcmask 130048
    %v604 = vsel %vm602, %v596, 0
    %v607 = vsel %vm602, %v597, 0
    %v610 = vsel %vm602, %v598, 0
    %v613 = vsel %vm602, %v599, 0
    %v616 = vsel %vm602, %v600, 0
    %v619 = vsel %vm602, %v601, 0
    %621 = vmatprep.subr.mxu0 0.0
    %622 = vmatpush1.msra.mxu0 %v594
    %623 = vmatprep.subr.mxu0 0.0
    %624 = vmatpush1.msra.mxu0 %v595
    %625 = vmatprep.subr.mxu0 0.0
    %626 = vmatpush1.msra.mxu0 0.0
    %627 = vmatprep.subr.mxu0 0.0
    %628 = vmatpush1.msra.mxu0 0.0
    %629 = vmatprep.subr.mxu0 0.0
    %630 = vmatpush1.msra.mxu0 0.0
    %631 = vmatprep.subr.mxu0 0.0
    %632 = vmatpush1.msra.mxu0 0.0
    %633 = vmatprep.subr.mxu0 0.0
    %634 = vmatpush1.msra.mxu0 0.0
    %635 = vmatprep.subr.mxu0 0.0
    %636 = vmatpush1.msra.mxu0 0.0
    %637 = vmatprep.subr.mxu0 0.0
    %638 = vmatpush1.msra.mxu0 0.0
    %639 = vmatprep.subr.mxu0 0.0
    %640 = vmatpush1.msra.mxu0 0.0
    %641 = vmatprep.subr.mxu0 0.0
    %642 = vmatpush1.msra.mxu0 0.0
    %643 = vmatprep.subr.mxu0 0.0
    %644 = vmatpush1.msra.mxu0 0.0
    %645 = vmatprep.subr.mxu0 0.0
    %646 = vmatpush1.msra.mxu0 0.0
    %647 = vmatprep.subr.mxu0 0.0
    %648 = vmatpush1.msra.mxu0 0.0
    %649 = vmatprep.subr.mxu0 0.0
    %650 = vmatpush1.msra.mxu0 0.0
    %651 = vmatprep.subr.mxu0 0.0
    %652 = vmatpush1.msra.mxu0 0.0
    %653 = vmatprep.subr.mxu0 0.0
    %654 = vmatpush1.msra.mxu0 0.0
    %655 = vmatprep.subr.mxu0 0.0
    %656 = vmatpush1.msra.mxu0 0.0
    %657 = vmatprep.subr.mxu0 0.0
    %658 = vmatpush1.msra.mxu0 0.0
    %659 = vmatprep.subr.mxu0 0.0
    %660 = vmatpush1.msra.mxu0 0.0
    %661 = vmatprep.subr.mxu0 0.0
    %662 = vmatpush1.msra.mxu0 0.0
    %663 = vmatprep.subr.mxu0 0.0
    %664 = vmatpush1.msra.mxu0 0.0
    %665 = vmatprep.subr.mxu0 0.0
    %666 = vmatpush1.msra.mxu0 0.0
    %667 = vmatprep.subr.mxu0 0.0
    %668 = vmatpush1.msra.mxu0 0.0
    %669 = vmatprep.subr.mxu0 0.0
    %670 = vmatpush1.msra.mxu0 0.0
    %671 = vmatprep.subr.mxu0 0.0
    %672 = vmatpush1.msra.mxu0 0.0
    %673 = vmatprep.subr.mxu0 0.0
    %674 = vmatpush1.msra.mxu0 0.0
    %675 = vmatprep.subr.mxu0 0.0
    %676 = vmatpush1.msra.mxu0 0.0
    %677 = vmatprep.subr.mxu0 0.0
    %678 = vmatpush1.msra.mxu0 0.0
    %679 = vmatprep.subr.mxu0 0.0
    %680 = vmatpush1.msra.mxu0 0.0
    %681 = vmatprep.subr.mxu0 0.0
    %682 = vmatpush1.msra.mxu0 0.0
    %683 = vmatprep.subr.mxu0 0.0
    %684 = vmatpush1.msra.mxu0 0.0
    %685 = vmatprep.mubr.f32.mxu0 0.0
    %686 = vmatmul.mubr.f32.gmra.mrb[0].mxu0 %v604
    %v687 = vpop.f32.mrb[0].mxu0
    %v688 = vadd.f32 0.0, %v687
    %v689 = vpop.f32.mrb[0].mxu0
    %690 = vmatprep.mubr.f32.mxu0 0.0
    %691 = vmatmul.mubr.f32.gmra.mrb[0].mxu0 %v607
    %v692 = vpop.f32.mrb[0].mxu0
    %v693 = vadd.f32 0.0, %v692
    %v694 = vpop.f32.mrb[0].mxu0
    %695 = vmatprep.mubr.f32.mxu0 0.0
    %696 = vmatmul.mubr.f32.gmra.mrb[0].mxu0 %v610
    %v697 = vpop.f32.mrb[0].mxu0
    %v698 = vadd.f32 0.0, %v697
    %v699 = vpop.f32.mrb[0].mxu0
    %700 = vmatprep.mubr.f32.mxu0 0.0
    %701 = vmatmul.mubr.f32.gmra.mrb[0].mxu0 %v613
    %v702 = vpop.f32.mrb[0].mxu0
    %v703 = vadd.f32 0.0, %v702
    %v704 = vpop.f32.mrb[0].mxu0
    %705 = vmatprep.mubr.f32.mxu0 0.0
    %706 = vmatmul.mubr.f32.gmra.mrb[0].mxu0 %v616
    %v707 = vpop.f32.mrb[0].mxu0
    %v708 = vadd.f32 0.0, %v707
    %v709 = vpop.f32.mrb[0].mxu0
    %710 = vmatprep.mubr.f32.mxu0 0.0
    %711 = vmatmul.mubr.f32.gmra.mrb[0].mxu0 %v619
    %v712 = vpop.f32.mrb[0].mxu0
    %v713 = vadd.f32 0.0, %v712
    %v714 = vpop.f32.mrb[0].mxu0
    %715 = vdwg.mxu0
    %v716 = vld [vmem:[%s4] sm:$0xff]
    %v717 = vld [vmem:[%s4 + $0x8] sm:$0xff]
    %v718 = vld [vmem:[%s4 + $0x10] sm:$0xff]
    %v719 = vld [vmem:[%s4 + $0x18] sm:$0xff]
    %v720 = vld [vmem:[%s4 + $0x20] sm:$0xff]
    %v721 = vld [vmem:[%s4 + $0x28] sm:$0xff]
    %v722 = vld [vmem:[%s4 + $0x30] sm:$0xff]
    %v723 = vld [vmem:[%s4 + $0x38] sm:$0xff]
    %v724 = vld [vmem:[%s4 + $0x40] sm:$0xff]
    %v725 = vld [vmem:[%s4 + $0x48] sm:$0xff]
    %v726 = vld [vmem:[%s4 + $0x50] sm:$0xff]
    %v727 = vld [vmem:[%s4 + $0x58] sm:$0xff]
    %v728 = vld [vmem:[%s4 + $0x60] sm:$0xff]
    %v729 = vld [vmem:[%s4 + $0x68] sm:$0xff]
    %v730 = vld [vmem:[%s4 + $0x70] sm:$0xff]
    %v731 = vld [vmem:[%s4 + $0x78] sm:$0xff]
    %732 = vmatprep.subr.mxu0 0.0
    %733 = vmatpush1.msra.mxu0 %v716
    %734 = vmatprep.subr.mxu0 0.0
    %735 = vmatpush1.msra.mxu0 %v717
    %736 = vmatprep.subr.mxu0 0.0
    %737 = vmatpush1.msra.mxu0 %v718
    %738 = vmatprep.subr.mxu0 0.0
    %739 = vmatpush1.msra.mxu0 %v719
    %740 = vmatprep.subr.mxu0 0.0
    %741 = vmatpush1.msra.mxu0 %v720
    %742 = vmatprep.subr.mxu0 0.0
    %743 = vmatpush1.msra.mxu0 %v721
    %744 = vmatprep.subr.mxu0 0.0
    %745 = vmatpush1.msra.mxu0 %v722
    %746 = vmatprep.subr.mxu0 0.0
    %747 = vmatpush1.msra.mxu0 %v723
    %748 = vmatprep.subr.mxu0 0.0
    %749 = vmatpush1.msra.mxu0 %v724
    %750 = vmatprep.subr.mxu0 0.0
    %751 = vmatpush1.msra.mxu0 %v725
    %752 = vmatprep.subr.mxu0 0.0
    %753 = vmatpush1.msra.mxu0 %v726
    %754 = vmatprep.subr.mxu0 0.0
    %755 = vmatpush1.msra.mxu0 %v727
    %756 = vmatprep.subr.mxu0 0.0
    %757 = vmatpush1.msra.mxu0 %v728
    %758 = vmatprep.subr.mxu0 0.0
    %759 = vmatpush1.msra.mxu0 %v729
    %760 = vmatprep.subr.mxu0 0.0
    %761 = vmatpush1.msra.mxu0 %v730
    %762 = vmatprep.subr.mxu0 0.0
    %763 = vmatpush1.msra.mxu0 %v731
    %764 = vmatprep.subr.mxu0 0.0
    %765 = vmatpush1.msra.mxu0 0.0
    %766 = vmatprep.subr.mxu0 0.0
    %767 = vmatpush1.msra.mxu0 0.0
    %768 = vmatprep.subr.mxu0 0.0
    %769 = vmatpush1.msra.mxu0 0.0
    %770 = vmatprep.subr.mxu0 0.0
    %771 = vmatpush1.msra.mxu0 0.0
    %772 = vmatprep.subr.mxu0 0.0
    %773 = vmatpush1.msra.mxu0 0.0
    %774 = vmatprep.subr.mxu0 0.0
    %775 = vmatpush1.msra.mxu0 0.0
    %776 = vmatprep.subr.mxu0 0.0
    %777 = vmatpush1.msra.mxu0 0.0
    %778 = vmatprep.subr.mxu0 0.0
    %779 = vmatpush1.msra.mxu0 0.0
    %780 = vmatprep.subr.mxu0 0.0
    %781 = vmatpush1.msra.mxu0 0.0
    %782 = vmatprep.subr.mxu0 0.0
    %783 = vmatpush1.msra.mxu0 0.0
    %784 = vmatprep.subr.mxu0 0.0
    %785 = vmatpush1.msra.mxu0 0.0
    %786 = vmatprep.subr.mxu0 0.0
    %787 = vmatpush1.msra.mxu0 0.0
    %788 = vmatprep.subr.mxu0 0.0
    %789 = vmatpush1.msra.mxu0 0.0
    %790 = vmatprep.subr.mxu0 0.0
    %791 = vmatpush1.msra.mxu0 0.0
    %792 = vmatprep.subr.mxu0 0.0
    %793 = vmatpush1.msra.mxu0 0.0
    %794 = vmatprep.subr.mxu0 0.0
    %795 = vmatpush1.msra.mxu0 0.0
    %796 = vmatprep.mubr.f32.mxu0 0.0
    %797 = vmatmul.mubr.f32.gmra.mrb[0].mxu0 %v688
    %v798 = vpop.f32.mrb[0].mxu0
    %v799 = vadd.f32 0.0, %v798
    %v800 = vpop.f32.mrb[0].mxu0
    %801 = vmatprep.mubr.f32.mxu0 0.0
    %802 = vmatmul.mubr.f32.gmra.mrb[0].mxu0 %v693
    %v803 = vpop.f32.mrb[0].mxu0
    %v804 = vadd.f32 0.0, %v803
    %v805 = vpop.f32.mrb[0].mxu0
    %806 = vdwg.mxu0
    %v807 = vlaneseq
    %v808 = vshrl.u32 %v807, 7
    %v809 = vsub.s32 1, %v808
    %v810 = vrot.slane %v30, %v809
    %v811 = vadd.f32 %v810, %v799
    %v812 = vadd.f32 %v810, %v804
    %v813 = vld [vmem:[%s4 + $0x80] sm:$0xff]
    %v814 = vld [vmem:[%s4 + $0x88] sm:$0xff]
    %v815 = vld [vmem:[%s4 + $0x90] sm:$0xff]
    %v816 = vld [vmem:[%s4 + $0x98] sm:$0xff]
    %v817 = vld [vmem:[%s4 + $0xa0] sm:$0xff]
    %v818 = vld [vmem:[%s4 + $0xa8] sm:$0xff]
    %v819 = vld [vmem:[%s4 + $0xb0] sm:$0xff]
    %v820 = vld [vmem:[%s4 + $0xb8] sm:$0xff]
    %v821 = vld [vmem:[%s4 + $0xc0] sm:$0xff]
    %v822 = vld [vmem:[%s4 + $0xc8] sm:$0xff]
    %v823 = vld [vmem:[%s4 + $0xd0] sm:$0xff]
    %v824 = vld [vmem:[%s4 + $0xd8] sm:$0xff]
    %v825 = vld [vmem:[%s4 + $0xe0] sm:$0xff]
    %v826 = vld [vmem:[%s4 + $0xe8] sm:$0xff]
    %v827 = vld [vmem:[%s4 + $0xf0] sm:$0xff]
    %v828 = vld [vmem:[%s4 + $0xf8] sm:$0xff]
    %829 = vmatprep.subr.mxu0 0.0
    %830 = vmatpush1.msra.mxu0 %v813
    %831 = vmatprep.subr.mxu0 0.0
    %832 = vmatpush1.msra.mxu0 %v814
    %833 = vmatprep.subr.mxu0 0.0
    %834 = vmatpush1.msra.mxu0 %v815
    %835 = vmatprep.subr.mxu0 0.0
    %836 = vmatpush1.msra.mxu0 %v816
    %837 = vmatprep.subr.mxu0 0.0
    %838 = vmatpush1.msra.mxu0 %v817
    %839 = vmatprep.subr.mxu0 0.0
    %840 = vmatpush1.msra.mxu0 %v818
    %841 = vmatprep.subr.mxu0 0.0
    %842 = vmatpush1.msra.mxu0 %v819
    %843 = vmatprep.subr.mxu0 0.0
    %844 = vmatpush1.msra.mxu0 %v820
    %845 = vmatprep.subr.mxu0 0.0
    %846 = vmatpush1.msra.mxu0 %v821
    %847 = vmatprep.subr.mxu0 0.0
    %848 = vmatpush1.msra.mxu0 %v822
    %849 = vmatprep.subr.mxu0 0.0
    %850 = vmatpush1.msra.mxu0 %v823
    %851 = vmatprep.subr.mxu0 0.0
    %852 = vmatpush1.msra.mxu0 %v824
    %853 = vmatprep.subr.mxu0 0.0
    %854 = vmatpush1.msra.mxu0 %v825
    %855 = vmatprep.subr.mxu0 0.0
    %856 = vmatpush1.msra.mxu0 %v826
    %857 = vmatprep.subr.mxu0 0.0
    %858 = vmatpush1.msra.mxu0 %v827
    %859 = vmatprep.subr.mxu0 0.0
    %860 = vmatpush1.msra.mxu0 %v828
    %861 = vmatprep.subr.mxu0 0.0
    %862 = vmatpush1.msra.mxu0 0.0
    %863 = vmatprep.subr.mxu0 0.0
    %864 = vmatpush1.msra.mxu0 0.0
    %865 = vmatprep.subr.mxu0 0.0
    %866 = vmatpush1.msra.mxu0 0.0
    %867 = vmatprep.subr.mxu0 0.0
    %868 = vmatpush1.msra.mxu0 0.0
    %869 = vmatprep.subr.mxu0 0.0
    %870 = vmatpush1.msra.mxu0 0.0
    %871 = vmatprep.subr.mxu0 0.0
    %872 = vmatpush1.msra.mxu0 0.0
    %873 = vmatprep.subr.mxu0 0.0
    %874 = vmatpush1.msra.mxu0 0.0
    %875 = vmatprep.subr.mxu0 0.0
    %876 = vmatpush1.msra.mxu0 0.0
    %877 = vmatprep.subr.mxu0 0.0
    %878 = vmatpush1.msra.mxu0 0.0
    %879 = vmatprep.subr.mxu0 0.0
    %880 = vmatpush1.msra.mxu0 0.0
    %881 = vmatprep.subr.mxu0 0.0
    %882 = vmatpush1.msra.mxu0 0.0
    %883 = vmatprep.subr.mxu0 0.0
    %884 = vmatpush1.msra.mxu0 0.0
    %885 = vmatprep.subr.mxu0 0.0
    %886 = vmatpush1.msra.mxu0 0.0
    %887 = vmatprep.subr.mxu0 0.0
    %888 = vmatpush1.msra.mxu0 0.0
    %889 = vmatprep.subr.mxu0 0.0
    %890 = vmatpush1.msra.mxu0 0.0
    %891 = vmatprep.subr.mxu0 0.0
    %892 = vmatpush1.msra.mxu0 0.0
    %893 = vmatprep.mubr.f32.mxu0 0.0
    %894 = vmatmul.mubr.f32.gmra.mrb[0].mxu0 %v698
    %v895 = vpop.f32.mrb[0].mxu0
    %v896 = vadd.f32 0.0, %v895
    %v897 = vpop.f32.mrb[0].mxu0
    %898 = vmatprep.mubr.f32.mxu0 0.0
    %899 = vmatmul.mubr.f32.gmra.mrb[0].mxu0 %v703
    %v900 = vpop.f32.mrb[0].mxu0
    %v901 = vadd.f32 0.0, %v900
    %v902 = vpop.f32.mrb[0].mxu0
    %903 = vdwg.mxu0
    %v904 = vadd.f32 %v811, %v896
    %v905 = vadd.f32 %v812, %v901
    %v906 = vld [vmem:[%s4 + $0x100] sm:$0xff]
    %v907 = vld [vmem:[%s4 + $0x108] sm:$0xff]
    %v908 = vld [vmem:[%s4 + $0x110] sm:$0xff]
    %v909 = vld [vmem:[%s4 + $0x118] sm:$0xff]
    %v910 = vld [vmem:[%s4 + $0x120] sm:$0xff]
    %v911 = vld [vmem:[%s4 + $0x128] sm:$0xff]
    %v912 = vld [vmem:[%s4 + $0x130] sm:$0xff]
    %v913 = vld [vmem:[%s4 + $0x138] sm:$0xff]
    %v914 = vld [vmem:[%s4 + $0x140] sm:$0xff]
    %v915 = vld [vmem:[%s4 + $0x148] sm:$0xff]
    %v916 = vld [vmem:[%s4 + $0x150] sm:$0xff]
    %v917 = vld [vmem:[%s4 + $0x158] sm:$0xff]
    %v918 = vld [vmem:[%s4 + $0x160] sm:$0xff]
    %v919 = vld [vmem:[%s4 + $0x168] sm:$0xff]
    %v920 = vld [vmem:[%s4 + $0x170] sm:$0xff]
    %v921 = vld [vmem:[%s4 + $0x178] sm:$0xff]
    %922 = vmatprep.subr.mxu0 0.0
    %923 = vmatpush1.msra.mxu0 %v906
    %924 = vmatprep.subr.mxu0 0.0
    %925 = vmatpush1.msra.mxu0 %v907
    %926 = vmatprep.subr.mxu0 0.0
    %927 = vmatpush1.msra.mxu0 %v908
    %928 = vmatprep.subr.mxu0 0.0
    %929 = vmatpush1.msra.mxu0 %v909
    %930 = vmatprep.subr.mxu0 0.0
    %931 = vmatpush1.msra.mxu0 %v910
    %932 = vmatprep.subr.mxu0 0.0
    %933 = vmatpush1.msra.mxu0 %v911
    %934 = vmatprep.subr.mxu0 0.0
    %935 = vmatpush1.msra.mxu0 %v912
    %936 = vmatprep.subr.mxu0 0.0
    %937 = vmatpush1.msra.mxu0 %v913
    %938 = vmatprep.subr.mxu0 0.0
    %939 = vmatpush1.msra.mxu0 %v914
    %940 = vmatprep.subr.mxu0 0.0
    %941 = vmatpush1.msra.mxu0 %v915
    %942 = vmatprep.subr.mxu0 0.0
    %943 = vmatpush1.msra.mxu0 %v916
    %944 = vmatprep.subr.mxu0 0.0
    %945 = vmatpush1.msra.mxu0 %v917
    %946 = vmatprep.subr.mxu0 0.0
    %947 = vmatpush1.msra.mxu0 %v918
    %948 = vmatprep.subr.mxu0 0.0
    %949 = vmatpush1.msra.mxu0 %v919
    %950 = vmatprep.subr.mxu0 0.0
    %951 = vmatpush1.msra.mxu0 %v920
    %952 = vmatprep.subr.mxu0 0.0
    %953 = vmatpush1.msra.mxu0 %v921
    %954 = vmatprep.subr.mxu0 0.0
    %955 = vmatpush1.msra.mxu0 0.0
    %956 = vmatprep.subr.mxu0 0.0
    %957 = vmatpush1.msra.mxu0 0.0
    %958 = vmatprep.subr.mxu0 0.0
    %959 = vmatpush1.msra.mxu0 0.0
    %960 = vmatprep.subr.mxu0 0.0
    %961 = vmatpush1.msra.mxu0 0.0
    %962 = vmatprep.subr.mxu0 0.0
    %963 = vmatpush1.msra.mxu0 0.0
    %964 = vmatprep.subr.mxu0 0.0
    %965 = vmatpush1.msra.mxu0 0.0
    %966 = vmatprep.subr.mxu0 0.0
    %967 = vmatpush1.msra.mxu0 0.0
    %968 = vmatprep.subr.mxu0 0.0
    %969 = vmatpush1.msra.mxu0 0.0
    %970 = vmatprep.subr.mxu0 0.0
    %971 = vmatpush1.msra.mxu0 0.0
    %972 = vmatprep.subr.mxu0 0.0
    %973 = vmatpush1.msra.mxu0 0.0
    %974 = vmatprep.subr.mxu0 0.0
    %975 = vmatpush1.msra.mxu0 0.0
    %976 = vmatprep.subr.mxu0 0.0
    %977 = vmatpush1.msra.mxu0 0.0
    %978 = vmatprep.subr.mxu0 0.0
    %979 = vmatpush1.msra.mxu0 0.0
    %980 = vmatprep.subr.mxu0 0.0
    %981 = vmatpush1.msra.mxu0 0.0
    %982 = vmatprep.subr.mxu0 0.0
    %983 = vmatpush1.msra.mxu0 0.0
    %984 = vmatprep.subr.mxu0 0.0
    %985 = vmatpush1.msra.mxu0 0.0
    %986 = vmatprep.mubr.f32.mxu0 0.0
    %987 = vmatmul.mubr.f32.gmra.mrb[0].mxu0 %v708
    %v988 = vpop.f32.mrb[0].mxu0
    %v989 = vadd.f32 0.0, %v988
    %v990 = vpop.f32.mrb[0].mxu0
    %991 = vmatprep.mubr.f32.mxu0 0.0
    %992 = vmatmul.mubr.f32.gmra.mrb[0].mxu0 %v713
    %v993 = vpop.f32.mrb[0].mxu0
    %v994 = vadd.f32 0.0, %v993
    %v995 = vpop.f32.mrb[0].mxu0
    %996 = vdwg.mxu0
    %v997 = vadd.f32 %v904, %v989
    %v998 = vadd.f32 %v905, %v994
    %v999 = vmax.f32 %v997, 0.0
    %v1000 = vmax.f32 %v998, 0.0
    %1003 = vrot.lane.b32.xlu0 %v999, 96
    %v1004 = vpop.permute.xlu0 %1003
    %1005 = vrot.lane.b32.xlu0 %v1000, 96
    %v1006 = vpop.permute.xlu0 %1005
    %v1009 = vmax.f32 %v999, %v1004
    %v1010 = vmax.f32 %v1000, %v1006
    %v1011 = vmax.f32 %v1009, %v1010
    %v1012 = vld [vmem:[%s5] sm:$0xff]
    %v1013 = vld [vmem:[%s5 + $0x8] sm:$0xff]
    %v1014 = vld [vmem:[%s5 + $0x10] sm:$0xff]
    %v1015 = vld [vmem:[%s5 + $0x18] sm:$0xff]
    %v1016 = vld [vmem:[%s5 + $0x20] sm:$0xff]
    %v1017 = vld [vmem:[%s5 + $0x28] sm:$0xff]
    %v1018 = vld [vmem:[%s5 + $0x30] sm:$0xff]
    %v1019 = vld [vmem:[%s5 + $0x38] sm:$0xff]
    %v1021 = vrot.slane %v1011, 2
    %v1022 = vsel %vm48, %v1021, 0
    %1024 = vmatprep.subr.mxu0 0.0
    %1025 = vmatpush1.msra.mxu0 %v1016
    %1026 = vmatprep.subr.mxu0 0.0
    %1027 = vmatpush1.msra.mxu0 %v1017
    %1028 = vmatprep.subr.mxu0 0.0
    %1029 = vmatpush1.msra.mxu0 %v1018
    %1030 = vmatprep.subr.mxu0 0.0
    %1031 = vmatpush1.msra.mxu0 %v1019
    %1032 = vmatprep.subr.mxu0 0.0
    %1033 = vmatpush1.msra.mxu0 0.0
    %1034 = vmatprep.subr.mxu0 0.0
    %1035 = vmatpush1.msra.mxu0 0.0
    %1036 = vmatprep.subr.mxu0 0.0
    %1037 = vmatpush1.msra.mxu0 0.0
    %1038 = vmatprep.subr.mxu0 0.0
    %1039 = vmatpush1.msra.mxu0 0.0
    %1040 = vmatprep.subr.mxu0 0.0
    %1041 = vmatpush1.msra.mxu0 0.0
    %1042 = vmatprep.subr.mxu0 0.0
    %1043 = vmatpush1.msra.mxu0 0.0
    %1044 = vmatprep.subr.mxu0 0.0
    %1045 = vmatpush1.msra.mxu0 0.0
    %1046 = vmatprep.subr.mxu0 0.0
    %1047 = vmatpush1.msra.mxu0 0.0
    %1048 = vmatprep.subr.mxu0 0.0
    %1049 = vmatpush1.msra.mxu0 0.0
    %1050 = vmatprep.subr.mxu0 0.0
    %1051 = vmatpush1.msra.mxu0 0.0
    %1052 = vmatprep.subr.mxu0 0.0
    %1053 = vmatpush1.msra.mxu0 0.0
    %1054 = vmatprep.subr.mxu0 0.0
    %1055 = vmatpush1.msra.mxu0 0.0
    %1056 = vmatprep.subr.mxu0 0.0
    %1057 = vmatpush1.msra.mxu0 0.0
    %1058 = vmatprep.subr.mxu0 0.0
    %1059 = vmatpush1.msra.mxu0 0.0
    %1060 = vmatprep.subr.mxu0 0.0
    %1061 = vmatpush1.msra.mxu0 0.0
    %1062 = vmatprep.subr.mxu0 0.0
    %1063 = vmatpush1.msra.mxu0 0.0
    %1064 = vmatprep.subr.mxu0 0.0
    %1065 = vmatpush1.msra.mxu0 0.0
    %1066 = vmatprep.subr.mxu0 0.0
    %1067 = vmatpush1.msra.mxu0 0.0
    %1068 = vmatprep.subr.mxu0 0.0
    %1069 = vmatpush1.msra.mxu0 0.0
    %1070 = vmatprep.subr.mxu0 0.0
    %1071 = vmatpush1.msra.mxu0 0.0
    %1072 = vmatprep.subr.mxu0 0.0
    %1073 = vmatpush1.msra.mxu0 0.0
    %1074 = vmatprep.subr.mxu0 0.0
    %1075 = vmatpush1.msra.mxu0 0.0
    %1076 = vmatprep.subr.mxu0 0.0
    %1077 = vmatpush1.msra.mxu0 0.0
    %1078 = vmatprep.subr.mxu0 0.0
    %1079 = vmatpush1.msra.mxu0 0.0
    %1080 = vmatprep.subr.mxu0 0.0
    %1081 = vmatpush1.msra.mxu0 0.0
    %1082 = vmatprep.subr.mxu0 0.0
    %1083 = vmatpush1.msra.mxu0 0.0
    %1084 = vmatprep.subr.mxu0 0.0
    %1085 = vmatpush1.msra.mxu0 0.0
    %1086 = vmatprep.subr.mxu0 0.0
    %1087 = vmatpush1.msra.mxu0 0.0
    %1088 = vmatprep.mubr.f32.mxu0 0.0
    %1089 = vmatmul.mubr.f32.gmra.mrb[0].mxu0 %v1022
    %v1090 = vpop.f32.mrb[0].mxu0
    %v1091 = vadd.f32 0.0, %v1090
    %v1092 = vpop.f32.mrb[0].mxu0
    %1093 = vdwg.mxu0
    %v1094 = vsel %vm48, %v1011, 0
    %1096 = vmatprep.subr.mxu0 0.0
    %1097 = vmatpush1.msra.mxu0 %v1012
    %1098 = vmatprep.subr.mxu0 0.0
    %1099 = vmatpush1.msra.mxu0 %v1013
    %1100 = vmatprep.subr.mxu0 0.0
    %1101 = vmatpush1.msra.mxu0 %v1014
    %1102 = vmatprep.subr.mxu0 0.0
    %1103 = vmatpush1.msra.mxu0 %v1015
    %1104 = vmatprep.subr.mxu0 0.0
    %1105 = vmatpush1.msra.mxu0 0.0
    %1106 = vmatprep.subr.mxu0 0.0
    %1107 = vmatpush1.msra.mxu0 0.0
    %1108 = vmatprep.subr.mxu0 0.0
    %1109 = vmatpush1.msra.mxu0 0.0
    %1110 = vmatprep.subr.mxu0 0.0
    %1111 = vmatpush1.msra.mxu0 0.0
    %1112 = vmatprep.subr.mxu0 0.0
    %1113 = vmatpush1.msra.mxu0 0.0
    %1114 = vmatprep.subr.mxu0 0.0
    %1115 = vmatpush1.msra.mxu0 0.0
    %1116 = vmatprep.subr.mxu0 0.0
    %1117 = vmatpush1.msra.mxu0 0.0
    %1118 = vmatprep.subr.mxu0 0.0
    %1119 = vmatpush1.msra.mxu0 0.0
    %1120 = vmatprep.subr.mxu0 0.0
    %1121 = vmatpush1.msra.mxu0 0.0
    %1122 = vmatprep.subr.mxu0 0.0
    %1123 = vmatpush1.msra.mxu0 0.0
    %1124 = vmatprep.subr.mxu0 0.0
    %1125 = vmatpush1.msra.mxu0 0.0
    %1126 = vmatprep.subr.mxu0 0.0
    %1127 = vmatpush1.msra.mxu0 0.0
    %1128 = vmatprep.subr.mxu0 0.0
    %1129 = vmatpush1.msra.mxu0 0.0
    %1130 = vmatprep.subr.mxu0 0.0
    %1131 = vmatpush1.msra.mxu0 0.0
    %1132 = vmatprep.subr.mxu0 0.0
    %1133 = vmatpush1.msra.mxu0 0.0
    %1134 = vmatprep.subr.mxu0 0.0
    %1135 = vmatpush1.msra.mxu0 0.0
    %1136 = vmatprep.subr.mxu0 0.0
    %1137 = vmatpush1.msra.mxu0 0.0
    %1138 = vmatprep.subr.mxu0 0.0
    %1139 = vmatpush1.msra.mxu0 0.0
    %1140 = vmatprep.subr.mxu0 0.0
    %1141 = vmatpush1.msra.mxu0 0.0
    %1142 = vmatprep.subr.mxu0 0.0
    %1143 = vmatpush1.msra.mxu0 0.0
    %1144 = vmatprep.subr.mxu0 0.0
    %1145 = vmatpush1.msra.mxu0 0.0
    %1146 = vmatprep.subr.mxu0 0.0
    %1147 = vmatpush1.msra.mxu0 0.0
    %1148 = vmatprep.subr.mxu0 0.0
    %1149 = vmatpush1.msra.mxu0 0.0
    %1150 = vmatprep.subr.mxu0 0.0
    %1151 = vmatpush1.msra.mxu0 0.0
    %1152 = vmatprep.subr.mxu0 0.0
    %1153 = vmatpush1.msra.mxu0 0.0
    %1154 = vmatprep.subr.mxu0 0.0
    %1155 = vmatpush1.msra.mxu0 0.0
    %1156 = vmatprep.subr.mxu0 0.0
    %1157 = vmatpush1.msra.mxu0 0.0
    %1158 = vmatprep.subr.mxu0 0.0
    %1159 = vmatpush1.msra.mxu0 0.0
    %1160 = vmatprep.mubr.f32.mxu0 0.0
    %1161 = vmatmul.mubr.f32.gmra.mrb[0].mxu0 %v1094
    %v1162 = vpop.f32.mrb[0].mxu0
    %v1163 = vadd.f32 %v1091, %v1162
    %v1164 = vpop.f32.mrb[0].mxu0
    %1165 = vdwg.mxu0
    %v1166 = vld [vmem:[%s5 + $0x40] sm:$0xff]
    %v1167 = vld [vmem:[%s5 + $0x48] sm:$0xff]
    %v1168 = vld [vmem:[%s5 + $0x50] sm:$0xff]
    %v1169 = vld [vmem:[%s5 + $0x58] sm:$0xff]
    %v1170 = vrot.slane %v1011, 4
    %v1171 = vsel %vm48, %v1170, 0
    %1173 = vmatprep.subr.mxu0 0.0
    %1174 = vmatpush1.msra.mxu0 %v1166
    %1175 = vmatprep.subr.mxu0 0.0
    %1176 = vmatpush1.msra.mxu0 %v1167
    %1177 = vmatprep.subr.mxu0 0.0
    %1178 = vmatpush1.msra.mxu0 %v1168
    %1179 = vmatprep.subr.mxu0 0.0
    %1180 = vmatpush1.msra.mxu0 %v1169
    %1181 = vmatprep.subr.mxu0 0.0
    %1182 = vmatpush1.msra.mxu0 0.0
    %1183 = vmatprep.subr.mxu0 0.0
    %1184 = vmatpush1.msra.mxu0 0.0
    %1185 = vmatprep.subr.mxu0 0.0
    %1186 = vmatpush1.msra.mxu0 0.0
    %1187 = vmatprep.subr.mxu0 0.0
    %1188 = vmatpush1.msra.mxu0 0.0
    %1189 = vmatprep.subr.mxu0 0.0
    %1190 = vmatpush1.msra.mxu0 0.0
    %1191 = vmatprep.subr.mxu0 0.0
    %1192 = vmatpush1.msra.mxu0 0.0
    %1193 = vmatprep.subr.mxu0 0.0
    %1194 = vmatpush1.msra.mxu0 0.0
    %1195 = vmatprep.subr.mxu0 0.0
    %1196 = vmatpush1.msra.mxu0 0.0
    %1197 = vmatprep.subr.mxu0 0.0
    %1198 = vmatpush1.msra.mxu0 0.0
    %1199 = vmatprep.subr.mxu0 0.0
    %1200 = vmatpush1.msra.mxu0 0.0
    %1201 = vmatprep.subr.mxu0 0.0
    %1202 = vmatpush1.msra.mxu0 0.0
    %1203 = vmatprep.subr.mxu0 0.0
    %1204 = vmatpush1.msra.mxu0 0.0
    %1205 = vmatprep.subr.mxu0 0.0
    %1206 = vmatpush1.msra.mxu0 0.0
    %1207 = vmatprep.subr.mxu0 0.0
    %1208 = vmatpush1.msra.mxu0 0.0
    %1209 = vmatprep.subr.mxu0 0.0
    %1210 = vmatpush1.msra.mxu0 0.0
    %1211 = vmatprep.subr.mxu0 0.0
    %1212 = vmatpush1.msra.mxu0 0.0
    %1213 = vmatprep.subr.mxu0 0.0
    %1214 = vmatpush1.msra.mxu0 0.0
    %1215 = vmatprep.subr.mxu0 0.0
    %1216 = vmatpush1.msra.mxu0 0.0
    %1217 = vmatprep.subr.mxu0 0.0
    %1218 = vmatpush1.msra.mxu0 0.0
    %1219 = vmatprep.subr.mxu0 0.0
    %1220 = vmatpush1.msra.mxu0 0.0
    %1221 = vmatprep.subr.mxu0 0.0
    %1222 = vmatpush1.msra.mxu0 0.0
    %1223 = vmatprep.subr.mxu0 0.0
    %1224 = vmatpush1.msra.mxu0 0.0
    %1225 = vmatprep.subr.mxu0 0.0
    %1226 = vmatpush1.msra.mxu0 0.0
    %1227 = vmatprep.subr.mxu0 0.0
    %1228 = vmatpush1.msra.mxu0 0.0
    %1229 = vmatprep.subr.mxu0 0.0
    %1230 = vmatpush1.msra.mxu0 0.0
    %1231 = vmatprep.subr.mxu0 0.0
    %1232 = vmatpush1.msra.mxu0 0.0
    %1233 = vmatprep.subr.mxu0 0.0
    %1234 = vmatpush1.msra.mxu0 0.0
    %1235 = vmatprep.subr.mxu0 0.0
    %1236 = vmatpush1.msra.mxu0 0.0
    %1237 = vmatprep.mubr.f32.mxu0 0.0
    %1238 = vmatmul.mubr.f32.gmra.mrb[0].mxu0 %v1171
    %v1239 = vpop.f32.mrb[0].mxu0
    %v1240 = vadd.f32 0.0, %v1239
    %v1241 = vpop.f32.mrb[0].mxu0
    %1242 = vdwg.mxu0
    %v1243 = vadd.f32 %v1163, %v1240
    %v1244 = vld [vmem:[%s5 + $0x60] sm:$0xff]
    %v1245 = vld [vmem:[%s5 + $0x68] sm:$0xff]
    %v1246 = vld [vmem:[%s5 + $0x70] sm:$0xff]
    %v1247 = vld [vmem:[%s5 + $0x78] sm:$0xff]
    %v1248 = vrot.slane %v1011, 6
    %v1249 = vsel %vm48, %v1248, 0
    %1251 = vmatprep.subr.mxu0 0.0
    %1252 = vmatpush1.msra.mxu0 %v1244
    %1253 = vmatprep.subr.mxu0 0.0
    %1254 = vmatpush1.msra.mxu0 %v1245
    %1255 = vmatprep.subr.mxu0 0.0
    %1256 = vmatpush1.msra.mxu0 %v1246
    %1257 = vmatprep.subr.mxu0 0.0
    %1258 = vmatpush1.msra.mxu0 %v1247
    %1259 = vmatprep.subr.mxu0 0.0
    %1260 = vmatpush1.msra.mxu0 0.0
    %1261 = vmatprep.subr.mxu0 0.0
    %1262 = vmatpush1.msra.mxu0 0.0
    %1263 = vmatprep.subr.mxu0 0.0
    %1264 = vmatpush1.msra.mxu0 0.0
    %1265 = vmatprep.subr.mxu0 0.0
    %1266 = vmatpush1.msra.mxu0 0.0
    %1267 = vmatprep.subr.mxu0 0.0
    %1268 = vmatpush1.msra.mxu0 0.0
    %1269 = vmatprep.subr.mxu0 0.0
    %1270 = vmatpush1.msra.mxu0 0.0
    %1271 = vmatprep.subr.mxu0 0.0
    %1272 = vmatpush1.msra.mxu0 0.0
    %1273 = vmatprep.subr.mxu0 0.0
    %1274 = vmatpush1.msra.mxu0 0.0
    %1275 = vmatprep.subr.mxu0 0.0
    %1276 = vmatpush1.msra.mxu0 0.0
    %1277 = vmatprep.subr.mxu0 0.0
    %1278 = vmatpush1.msra.mxu0 0.0
    %1279 = vmatprep.subr.mxu0 0.0
    %1280 = vmatpush1.msra.mxu0 0.0
    %1281 = vmatprep.subr.mxu0 0.0
    %1282 = vmatpush1.msra.mxu0 0.0
    %1283 = vmatprep.subr.mxu0 0.0
    %1284 = vmatpush1.msra.mxu0 0.0
    %1285 = vmatprep.subr.mxu0 0.0
    %1286 = vmatpush1.msra.mxu0 0.0
    %1287 = vmatprep.subr.mxu0 0.0
    %1288 = vmatpush1.msra.mxu0 0.0
    %1289 = vmatprep.subr.mxu0 0.0
    %1290 = vmatpush1.msra.mxu0 0.0
    %1291 = vmatprep.subr.mxu0 0.0
    %1292 = vmatpush1.msra.mxu0 0.0
    %1293 = vmatprep.subr.mxu0 0.0
    %1294 = vmatpush1.msra.mxu0 0.0
    %1295 = vmatprep.subr.mxu0 0.0
    %1296 = vmatpush1.msra.mxu0 0.0
    %1297 = vmatprep.subr.mxu0 0.0
    %1298 = vmatpush1.msra.mxu0 0.0
    %1299 = vmatprep.subr.mxu0 0.0
    %1300 = vmatpush1.msra.mxu0 0.0
    %1301 = vmatprep.subr.mxu0 0.0
    %1302 = vmatpush1.msra.mxu0 0.0
    %1303 = vmatprep.subr.mxu0 0.0
    %1304 = vmatpush1.msra.mxu0 0.0
    %1305 = vmatprep.subr.mxu0 0.0
    %1306 = vmatpush1.msra.mxu0 0.0
    %1307 = vmatprep.subr.mxu0 0.0
    %1308 = vmatpush1.msra.mxu0 0.0
    %1309 = vmatprep.subr.mxu0 0.0
    %1310 = vmatpush1.msra.mxu0 0.0
    %1311 = vmatprep.subr.mxu0 0.0
    %1312 = vmatpush1.msra.mxu0 0.0
    %1313 = vmatprep.subr.mxu0 0.0
    %1314 = vmatpush1.msra.mxu0 0.0
    %1315 = vmatprep.mubr.f32.mxu0 0.0
    %1316 = vmatmul.mubr.f32.gmra.mrb[0].mxu0 %v1249
    %v1317 = vpop.f32.mrb[0].mxu0
    %v1318 = vadd.f32 0.0, %v1317
    %v1319 = vpop.f32.mrb[0].mxu0
    %1320 = vdwg.mxu0
    %v1321 = vadd.f32 %v1243, %v1318
    %vm1322 = vcmask 517120
    %v1323 = vsel %vm1322, %v1321, 0.0
    %v1324 = vrot.slane %v1323, 4
    %v1325 = vadd.f32 %v1323, %v1324
    %v1326 = vrot.slane %v1325, 2
    %v1327 = vadd.f32 %v1325, %v1326
    %v1328 = vrot.slane %v1327, 1
    %v1329 = vadd.f32 %v1327, %v1328
    %v1330 = vrcp.pop 2.0
    %v1331 = vmul.f32 %v1329, %v1330
    %v1332 = vsub.f32 %v1321, %v1331
    %v1333 = vmul.f32 %v1332, %v1332
    %v1334 = vsel %vm1322, %v1333, 0.0
    %v1335 = vrot.slane %v1334, 4
    %v1336 = vadd.f32 %v1334, %v1335
    %v1337 = vrot.slane %v1336, 2
    %v1338 = vadd.f32 %v1336, %v1337
    %v1339 = vrot.slane %v1338, 1
    %v1340 = vadd.f32 %v1338, %v1339
    %v1341 = vmul.f32 %v1340, %v1330
    %v1342 = vadd.f32 %v1341, 1e-05
    %v1343 = vrsqrt.pop %v1342
    %v1344 = vmul.f32 %v1332, %v1343
    %v1345 = vlaneseq
    %v1346 = vshrl.u32 %v1345, 7
    %v1347 = vsub.s32 2, %v1346
    %v1348 = vrot.slane %v30, %v1347
    %v1349 = vmul.f32 %v1344, %v1348
    %v1350 = vlaneseq
    %v1351 = vshrl.u32 %v1350, 7
    %v1352 = vsub.s32 3, %v1351
    %v1353 = vrot.slane %v30, %v1352
    %v1354 = vadd.f32 %v1349, %v1353
    %v1355 = vmax.f32 %v1354, 0.0
    %v1356 = vld [vmem:[%s6] sm:$0xff]
    %v1357 = vld [vmem:[%s6 + $0x8] sm:$0xff]
    %v1358 = vld [vmem:[%s6 + $0x10] sm:$0xff]
    %v1359 = vld [vmem:[%s6 + $0x18] sm:$0xff]
    %v1360 = vld [vmem:[%s6 + $0x20] sm:$0xff]
    %v1361 = vld [vmem:[%s6 + $0x28] sm:$0xff]
    %v1362 = vld [vmem:[%s6 + $0x30] sm:$0xff]
    %v1363 = vld [vmem:[%s6 + $0x38] sm:$0xff]
    %v1364 = vlaneseq
    %v1365 = vshrl.u32 %v1364, 7
    %v1366 = vsub.s32 4, %v1365
    %v1367 = vrot.slane %v30, %v1366
    %vm1368 = vcmask 523264
    %v1370 = vsel %vm1368, %v1355, 0
    %1372 = vmatprep.subr.mxu0 0.0
    %1373 = vmatpush1.msra.mxu0 %v1356
    %1374 = vmatprep.subr.mxu0 0.0
    %1375 = vmatpush1.msra.mxu0 %v1357
    %1376 = vmatprep.subr.mxu0 0.0
    %1377 = vmatpush1.msra.mxu0 %v1358
    %1378 = vmatprep.subr.mxu0 0.0
    %1379 = vmatpush1.msra.mxu0 %v1359
    %1380 = vmatprep.subr.mxu0 0.0
    %1381 = vmatpush1.msra.mxu0 %v1360
    %1382 = vmatprep.subr.mxu0 0.0
    %1383 = vmatpush1.msra.mxu0 %v1361
    %1384 = vmatprep.subr.mxu0 0.0
    %1385 = vmatpush1.msra.mxu0 %v1362
    %1386 = vmatprep.subr.mxu0 0.0
    %1387 = vmatpush1.msra.mxu0 %v1363
    %1388 = vmatprep.subr.mxu0 0.0
    %1389 = vmatpush1.msra.mxu0 0.0
    %1390 = vmatprep.subr.mxu0 0.0
    %1391 = vmatpush1.msra.mxu0 0.0
    %1392 = vmatprep.subr.mxu0 0.0
    %1393 = vmatpush1.msra.mxu0 0.0
    %1394 = vmatprep.subr.mxu0 0.0
    %1395 = vmatpush1.msra.mxu0 0.0
    %1396 = vmatprep.subr.mxu0 0.0
    %1397 = vmatpush1.msra.mxu0 0.0
    %1398 = vmatprep.subr.mxu0 0.0
    %1399 = vmatpush1.msra.mxu0 0.0
    %1400 = vmatprep.subr.mxu0 0.0
    %1401 = vmatpush1.msra.mxu0 0.0
    %1402 = vmatprep.subr.mxu0 0.0
    %1403 = vmatpush1.msra.mxu0 0.0
    %1404 = vmatprep.subr.mxu0 0.0
    %1405 = vmatpush1.msra.mxu0 0.0
    %1406 = vmatprep.subr.mxu0 0.0
    %1407 = vmatpush1.msra.mxu0 0.0
    %1408 = vmatprep.subr.mxu0 0.0
    %1409 = vmatpush1.msra.mxu0 0.0
    %1410 = vmatprep.subr.mxu0 0.0
    %1411 = vmatpush1.msra.mxu0 0.0
    %1412 = vmatprep.subr.mxu0 0.0
    %1413 = vmatpush1.msra.mxu0 0.0
    %1414 = vmatprep.subr.mxu0 0.0
    %1415 = vmatpush1.msra.mxu0 0.0
    %1416 = vmatprep.subr.mxu0 0.0
    %1417 = vmatpush1.msra.mxu0 0.0
    %1418 = vmatprep.subr.mxu0 0.0
    %1419 = vmatpush1.msra.mxu0 0.0
    %1420 = vmatprep.subr.mxu0 0.0
    %1421 = vmatpush1.msra.mxu0 0.0
    %1422 = vmatprep.subr.mxu0 0.0
    %1423 = vmatpush1.msra.mxu0 0.0
    %1424 = vmatprep.subr.mxu0 0.0
    %1425 = vmatpush1.msra.mxu0 0.0
    %1426 = vmatprep.subr.mxu0 0.0
    %1427 = vmatpush1.msra.mxu0 0.0
    %1428 = vmatprep.subr.mxu0 0.0
    %1429 = vmatpush1.msra.mxu0 0.0
    %1430 = vmatprep.subr.mxu0 0.0
    %1431 = vmatpush1.msra.mxu0 0.0
    %1432 = vmatprep.subr.mxu0 0.0
    %1433 = vmatpush1.msra.mxu0 0.0
    %1434 = vmatprep.subr.mxu0 0.0
    %1435 = vmatpush1.msra.mxu0 0.0
    %1436 = vmatprep.mubr.f32.mxu0 0.0
    %1437 = vmatmul.mubr.f32.gmra.mrb[0].mxu0 %v1370
    %v1438 = vpop.f32.mrb[0].mxu0
    %v1439 = vadd.f32 %v1367, %v1438
    %v1440 = vpop.f32.mrb[0].mxu0
    %1441 = vdwg.mxu0
    %1442 = vst [vmem:[#allocation2] sm:$0x3] %v1439
    // Predicated region
    $region34: #{simclr_forward.1} parent=1 // pred_check
      _
    $region35: #{simclr_forward.1} parent=1 // pred_check_branch
      %1444 = sbr.rel (0) target = $region37
    $region36: #{simclr_forward.1} parent=1 // pred_region
      %s1446 = ssub.s32 32, 32
      %1447 = vsyncadd [#allocation3], %s1446
      %s1449 = sshll.u32 [#allocation2], 4
      %s1450 = int_to_ptr.vmem [resolvable:$true] %s1449
      %1452 = dma.vmem_to_hbm [thread:$0]  %s1450, 32, %s8, [#allocation3]
    $region37: #{simclr_forward.1} parent=1 // pred_fallthru
      _
    // Predicated region
    $region38: #{simclr_forward.1} parent=1 // pred_check
      _
    $region39: #{simclr_forward.1} parent=1 // pred_check_branch
      %1454 = sbr.rel (0) target = $region41
    $region40: #{simclr_forward.1} parent=1 // pred_region
      %1455 = dma.done [#allocation3], 32
    $region41: #{simclr_forward.1} parent=1 // pred_fallthru
      _
    %1456 = vsyncpa [#allocation3], 1

</llo_original>
